<compile_context>
chip_gen: v6e
topology: v6e:2x2x1
jax: 0.10.0
libtpu: 0.0.40
codegen_flags: <defaults>
</compile_context>

<pallas_src>
import functools
import math

import numpy as np
import jax
import jax.numpy as jnp
from jax.experimental import pallas as pl
from jax.experimental.pallas import tpu as pltpu


# --------------------------------------------------------------------------
# Small helpers
# --------------------------------------------------------------------------
def _round_up(v, m):
    return ((v + m - 1) // m) * m


def _vmem_limit_bytes():
    """Per-generation VMEM limit: ~3/4 of physical, never the full capacity."""
    cap = None
    try:
        info = pltpu.get_tpu_info()
        for name in ("vmem_capacity_bytes", "vmem_bytes", "vmem_size_bytes"):
            v = getattr(info, name, None)
            if v:
                cap = int(v)
                break
    except Exception:
        cap = None
    if cap is None:
        cap = 64 * 1024 * 1024          # conservative: v7x per-TC capacity
    limit = (cap * 3) // 4              # 48 MiB on v7x, 96 MiB on v5e/v6e
    return max(32 * 1024 * 1024, min(100 * 1024 * 1024, limit))


def _pick_row_tile(N, block_n):
    """Row tile: sublane-aligned, and >=2 grid steps when N is large enough."""
    if N <= 8:
        return N                        # too small to split at sublane granularity
    tn = min(block_n, N)
    if tn == N and N >= 16:
        half = _round_up((N + 1) // 2, 8)
        if half < N:
            tn = half                   # >=2 steps -> megacore split + pipelining
    if tn != N and tn % 8 != 0:
        tn = N
    return tn


def _pick_k_tile(K, HW, Rp, Cp, C, tn, x_itemsize, budget, k_tile):
    """K-chunk size: multiple of HW (whole channels), lane-aligned, divides K."""

    def footprint(tk, resident):
        w6 = (K if resident else 2 * tk) * Rp * 2          # bf16 w6 (1 or 2 bufs)
        w_small = Rp * Rp * 2 + 2 * Rp * 4                 # w7 + biases (single buf)
        x_tile = 2 * tn * tk * x_itemsize + tn * tk * 2    # dbl-buf x + bf16 cast
        outs = 2 * tn * (Rp + Cp) * 4                      # dbl-buf outputs
        scratch = tn * Rp * 4 + tn * C * 4                 # acc + pool scratch
        return w6 + w_small + x_tile + outs + scratch

    if k_tile is not None:
        tk = int(k_tile)
    elif footprint(K, True) <= budget:
        tk = K                                             # fully resident w6
    else:
        step = (HW * 128) // math.gcd(HW, 128)             # lcm(HW, 128)
        cands = [m for m in range(step, K, step) if K % m == 0]
        tk = K                                             # fallback: resident
        for m in sorted(cands, reverse=True):
            if footprint(m, False) <= budget:
                tk = m
                break
        else:
            if cands:
                tk = cands[0]                              # smallest aligned chunk
        # TODO(synk): if K has no chunk aligned to lcm(HW,128), w6 stays resident.
    assert K % tk == 0 and tk % HW == 0, "K tile must cover whole channels"
    assert tk % 128 == 0 or tk == K, "K tile must be lane-aligned"
    return tk, K // tk


def _bspec(shape, index_map, mode):
    if mode is None:
        return pl.BlockSpec(shape, index_map)
    return pl.BlockSpec(shape, index_map, pipeline_mode=mode)


# --------------------------------------------------------------------------
# Kernels
# --------------------------------------------------------------------------
def _mlp_finalize(acc, b6_ref, w7_ref, b7_ref, out_dtype):
    """bias+ReLU (f32 VPU), fc7 on the MXU (bf16 operands, f32 accum), ReLU."""
    h = jnp.maximum(acc + b6_ref[...], 0.0)
    h = jnp.dot(h.astype(w7_ref.dtype), w7_ref[...],
                preferred_element_type=jnp.float32)
    h = jnp.maximum(h + b7_ref[...], 0.0)
    return h.astype(out_dtype)


def _head_pool_kernel(x_ref, w6_ref, b6_ref, w7_ref, b7_ref,
                      res4_ref, res5_ref, acc_ref, pool_ref,
                      *, HW, C, Cp, num_kt):
    k = pl.program_id(1)

    @pl.when(k == 0)
    def _init():
        acc_ref[...] = jnp.zeros_like(acc_ref)

    x = x_ref[...]                                   # (tn, tk): single DMA of chunk
    xb = x if x.dtype == w6_ref.dtype else x.astype(w6_ref.dtype)
    acc_ref[...] += jnp.dot(xb, w6_ref[...], preferred_element_type=jnp.float32)

    # adaptive_max_pool2d(x, 1).flatten(1): per-channel max over the spatial
    # slice.  Each K-chunk covers whole channels (tk % HW == 0), so one grouped
    # lane reduce per chunk; per-chunk results land in a small VMEM scratch.
    tn, tk = x.shape
    cpk = tk // HW
    pool_ref[k] = jnp.max(x.reshape(tn, cpk, HW), axis=-1).astype(pool_ref.dtype)

    @pl.when(k == num_kt - 1)
    def _finalize():
        res5_ref[...] = _mlp_finalize(acc_ref[...], b6_ref, w7_ref, b7_ref,
                                      res5_ref.dtype)
        parts = [pool_ref[j] for j in range(num_kt)]
        pooled = parts[0] if num_kt == 1 else jnp.concatenate(parts, axis=-1)
        if Cp > C:                                   # lane-dense (tn, Cp) store
            pooled = jnp.concatenate(
                [pooled, jnp.zeros((tn, Cp - C), pooled.dtype)], axis=-1)
        res4_ref[...] = pooled.astype(res4_ref.dtype)


def _head_nopool_kernel(x_ref, w6_ref, b6_ref, w7_ref, b7_ref,
                        res5_ref, acc_ref, *, num_kt):
    k = pl.program_id(1)

    @pl.when(k == 0)
    def _init():
        acc_ref[...] = jnp.zeros_like(acc_ref)

    x = x_ref[...]
    xb = x if x.dtype == w6_ref.dtype else x.astype(w6_ref.dtype)
    acc_ref[...] += jnp.dot(xb, w6_ref[...], preferred_element_type=jnp.float32)

    @pl.when(k == num_kt - 1)
    def _finalize():
        res5_ref[...] = _mlp_finalize(acc_ref[...], b6_ref, w7_ref, b7_ref,
                                      res5_ref.dtype)


# --------------------------------------------------------------------------
# Wrapper
# --------------------------------------------------------------------------
def ms_two_mlp_head(x, w6, b6, w7, b7, *, return_res4=True, GAP=True,
                    block_n=256, k_tile=None, weight_dtype=jnp.bfloat16):
    """Pallas forward for MSTwoMLPHead.

    x: (N, C, H, W).  w6: (C*H*W, R), w7: (R, R) stored as (in, out) so the
    kernel computes y = x @ W + b (== torch x @ W.T + b).  Returns a dict
    matching the PyTorch module's OrderedDict.
    """
    N, C, H, W = x.shape
    HW = H * W
    K = C * HW
    R = w6.shape[1]
    Rp = _round_up(R, 128)               # lane-dense representation dim
    Cp = _round_up(C, 128)               # lane-dense pooled-channel dim

    x_flat = x.reshape(N, K)             # torch .flatten(start_dim=1)

    # Zero-pad the representation dim to Rp (exact: padded columns stay 0
    # through bias+ReLU and the padded w7 rows are zero), cast weights to bf16.
    if Rp != R:
        w6 = jnp.pad(w6, ((0, 0), (0, Rp - R)))
        w7 = jnp.pad(w7, ((0, Rp - R), (0, Rp - R)))
        b6 = jnp.pad(b6, (0, Rp - R))
        b7 = jnp.pad(b7, (0, Rp - R))
    w6c = w6.astype(weight_dtype)
    w7c = w7.astype(weight_dtype)
    b6p = b6.reshape(1, Rp).astype(jnp.float32)
    b7p = b7.reshape(1, Rp).astype(jnp.float32)

    vmem_limit = _vmem_limit_bytes()
    tn = _pick_row_tile(N, block_n)
    tk, num_kt = _pick_k_tile(K, HW, Rp, Cp, C, tn, x.dtype.itemsize,
                              vmem_limit, k_tile)
    cpk = tk // HW
    grid = (pl.cdiv(N, tn), num_kt)

    need_pool = GAP and return_res4      # pooling only matters on this path
    out_dtype = x.dtype

    w_itemsize = np.dtype(weight_dtype).itemsize
    flops = 2 * N * (K * Rp + Rp * Rp)
    bytes_accessed = (N * K * x.dtype.itemsize
                      + (K * Rp + Rp * Rp + 2 * Rp) * w_itemsize
                      + N * (Rp + (Cp if need_pool else 0))
                      * np.dtype(out_dtype).itemsize)
    cost = pl.CostEstimate(flops=int(flops), transcendentals=0,
                           bytes_accessed=int(bytes_accessed))

    compiler_params = pltpu.CompilerParams(
        dimension_semantics=("parallel", "arbitrary"),   # rows x K-reduction
        vmem_limit_bytes=vmem_limit,
    )

    def _call(single_buffer_consts):
        # Resident (constant index_map) operands are single-buffered to halve
        # their VMEM footprint; w6 keeps default double-buffering when it
        # streams over K, as do x and the outputs.
        const_mode = pl.Buffered(1) if single_buffer_consts else None
        w6_mode = const_mode if num_kt == 1 else None

        x_spec = pl.BlockSpec((tn, tk), lambda i, k: (i, k))
        w6_spec = _bspec((tk, Rp), lambda i, k: (k, 0), w6_mode)
        b6_spec = _bspec((1, Rp), lambda i, k: (0, 0), const_mode)
        w7_spec = _bspec((Rp, Rp), lambda i, k: (0, 0), const_mode)
        b7_spec = _bspec((1, Rp), lambda i, k: (0, 0), const_mode)
        res5_spec = pl.BlockSpec((tn, Rp), lambda i, k: (i, 0))

        scratch = [pltpu.VMEM((tn, Rp), jnp.float32)]        # fc6 accumulator

        if need_pool:
            res4_spec = pl.BlockSpec((tn, Cp), lambda i, k: (i, 0))
            scratch.append(pltpu.VMEM((num_kt, tn, cpk), jnp.float32))
            kernel = functools.partial(_head_pool_kernel, HW=HW, C=C, Cp=Cp,
                                       num_kt=num_kt)
            return pl.pallas_call(
                kernel,
                grid=grid,
                out_shape=(jax.ShapeDtypeStruct((N, Cp), out_dtype),
                           jax.ShapeDtypeStruct((N, Rp), out_dtype)),
                in_specs=[x_spec, w6_spec, b6_spec, w7_spec, b7_spec],
                out_specs=(res4_spec, res5_spec),
                scratch_shapes=scratch,
                compiler_params=compiler_params,
                cost_estimate=cost,
            )(x_flat, w6c, b6p, w7c, b7p)

        kernel = functools.partial(_head_nopool_kernel, num_kt=num_kt)
        return pl.pallas_call(
            kernel,
            grid=grid,
            out_shape=jax.ShapeDtypeStruct((N, Rp), out_dtype),
            in_specs=[x_spec, w6_spec, b6_spec, w7_spec, b7_spec],
            out_specs=res5_spec,
            scratch_shapes=scratch,
            compiler_params=compiler_params,
            cost_estimate=cost,
        )(x_flat, w6c, b6p, w7c, b7p)

    try:
        result = _call(True)
    except Exception:
        result = _call(False)            # pipeline_mode=Buffered(1) unsupported

    if need_pool:
        res4_pad, res5_pad = result
        res4 = res4_pad if Cp == C else res4_pad[:, :C]
    else:
        res5_pad = result
    res5 = res5_pad if Rp == R else res5_pad[:, :R]

    # TODO(synk): PyTorch uses adaptive_avg_pool2d when x.numel() == 0; that
    # empty-input branch is unreachable with static, non-empty kernel shapes.
    out = {}
    if return_res4:
        # GAP=False: the PyTorch module returns x untouched as feat_res4.
        out["feat_res4"] = res4 if GAP else x
    out["feat_res5"] = res5
    return out


# --------------------------------------------------------------------------
# Reference + test
# --------------------------------------------------------------------------
def _reference(x, w6, b6, w7, b7):
    N = x.shape[0]
    feat = x.reshape(N, -1)
    feat = jnp.maximum(feat @ w6 + b6, 0.0)
    feat = jnp.maximum(feat @ w7 + b7, 0.0)
    pooled = jnp.max(x.reshape(N, x.shape[1], -1), axis=-1)
    return pooled, feat


if __name__ == "__main__":
    # Module hyper-params: in_channels=4, resolution=16, representation_size=32
    N, C, RES, REP = 2, 4, 16, 32
    K = C * RES * RES

    key = jax.random.PRNGKey(0)
    kx, k6w, k6b, k7w, k7b = jax.random.split(key, 5)

    x = jax.random.normal(kx, (N, C, RES, RES), dtype=jnp.float32)
    # nn.Linear-style uniform init (deterministic), stored as (in, out)
    lim6 = 1.0 / (K ** 0.5)
    w6 = jax.random.uniform(k6w, (K, REP), jnp.float32, -lim6, lim6)
    b6 = jax.random.uniform(k6b, (REP,), jnp.float32, -lim6, lim6)
    lim7 = 1.0 / (REP ** 0.5)
    w7 = jax.random.uniform(k7w, (REP, REP), jnp.float32, -lim7, lim7)
    b7 = jax.random.uniform(k7b, (REP,), jnp.float32, -lim7, lim7)

    ref_res4, ref_res5 = _reference(x, w6, b6, w7, b7)

    # 1) Default path (resident bf16 weights, single K tile).
    out = ms_two_mlp_head(x, w6, b6, w7, b7, return_res4=True, GAP=True)
    jax.block_until_ready(out)
    assert out["feat_res4"].shape == (N, C)
    assert out["feat_res5"].shape == (N, REP)
    # Pooling is exact f32; the MLP path uses bf16 MXU operands with f32 accum.
    assert jnp.allclose(out["feat_res4"], ref_res4, atol=1e-5, rtol=1e-5)
    assert jnp.allclose(out["feat_res5"], ref_res5, atol=2e-2, rtol=2e-2)

    # 2) Forced K-streaming path (exercises the accumulator / per-chunk pooling
    #    used on v7x when resident weights do not fit the VMEM budget).
    out_k = ms_two_mlp_head(x, w6, b6, w7, b7, return_res4=True, GAP=True,
                            k_tile=256)
    jax.block_until_ready(out_k)
    assert jnp.allclose(out_k["feat_res4"], ref_res4, atol=1e-5, rtol=1e-5)
    assert jnp.allclose(out_k["feat_res5"], ref_res5, atol=2e-2, rtol=2e-2)

    # 3) feat_res5-only variant (no pooling work at all).
    out2 = ms_two_mlp_head(x, w6, b6, w7, b7, return_res4=False, GAP=True)
    jax.block_until_ready(out2)
    assert "feat_res4" not in out2
    assert jnp.allclose(out2["feat_res5"], ref_res5, atol=2e-2, rtol=2e-2)

    print("KERNEL_OK")
</pallas_src>

<mosaic_0001>
module attributes {stable_mosaic.version = 11 : i64} {
  func.func @_head_pool_kernel(%arg0: i32, %arg1: i32, %arg2: memref<2x1024xf32, #tpu.memory_space<vmem>>, %arg3: memref<1024x128xbf16, #tpu.memory_space<vmem>>, %arg4: memref<1x128xf32, #tpu.memory_space<vmem>>, %arg5: memref<128x128xbf16, #tpu.memory_space<vmem>>, %arg6: memref<1x128xf32, #tpu.memory_space<vmem>>, %arg7: memref<2x128xf32, #tpu.memory_space<vmem>>, %arg8: memref<2x128xf32, #tpu.memory_space<vmem>>, %arg9: memref<2x128xf32, #tpu.memory_space<vmem>>, %arg10: memref<1x2x4xf32, #tpu.memory_space<vmem>>) attributes {dimension_semantics = [#tpu.dimension_semantics<parallel>, #tpu.dimension_semantics<arbitrary>], iteration_bounds = array<i64: 1, 1>, scalar_prefetch = 0 : i64, scratch_operands = 2 : i64, tpu.core_type = #tpu.core_type<tc>, window_params = [{transform_indices = @transform_0, window_bounds = array<i64: 2, 1024>}, {pipeline_mode = #tpu.pipeline_mode<synchronous>, transform_indices = @transform_1, window_bounds = array<i64: 1024, 128>}, {pipeline_mode = #tpu.pipeline_mode<synchronous>, transform_indices = @transform_2, window_bounds = array<i64: 1, 128>}, {pipeline_mode = #tpu.pipeline_mode<synchronous>, transform_indices = @transform_3, window_bounds = array<i64: 128, 128>}, {pipeline_mode = #tpu.pipeline_mode<synchronous>, transform_indices = @transform_4, window_bounds = array<i64: 1, 128>}, {transform_indices = @transform_5, window_bounds = array<i64: 2, 128>}, {transform_indices = @transform_6, window_bounds = array<i64: 2, 128>}]} {
    %c0_i32 = arith.constant 0 : i32
    %0 = arith.cmpi eq, %arg1, %c0_i32 : i32
    %1 = arith.extui %0 : i1 to i32
    %c0_i32_0 = arith.constant 0 : i32
    %2 = arith.cmpi ne, %1, %c0_i32_0 : i32
    scf.if %2 {
      %cst_13 = arith.constant 0.000000e+00 : f32
      %19 = vector.broadcast %cst_13 : f32 to vector<2x128xf32>
      %c0_14 = arith.constant 0 : index
      %c0_15 = arith.constant 0 : index
      %20 = vector.load %arg9[%c0_14, %c0_15] : memref<2x128xf32, #tpu.memory_space<vmem>>, vector<2x128xf32>
      tpu.vector_store %arg9[%c0_14, %c0_15], %19 {strides = array<i32>} : memref<2x128xf32, #tpu.memory_space<vmem>>, vector<2x128xf32>,
    } else {
    }
    %c0 = arith.constant 0 : index
    %c0_1 = arith.constant 0 : index
    %3 = vector.load %arg2[%c0, %c0_1] : memref<2x1024xf32, #tpu.memory_space<vmem>>, vector<2x1024xf32>
    %4 = arith.truncf %3 : vector<2x1024xf32> to vector<2x1024xbf16>
    %c0_2 = arith.constant 0 : index
    %c0_3 = arith.constant 0 : index
    %5 = vector.load %arg9[%c0_2, %c0_3] : memref<2x128xf32, #tpu.memory_space<vmem>>, vector<2x128xf32>
    %c0_4 = arith.constant 0 : index
    %c0_5 = arith.constant 0 : index
    %6 = vector.load %arg3[%c0_4, %c0_5] : memref<1024x128xbf16, #tpu.memory_space<vmem>>, vector<1024x128xbf16>
    %cst = arith.constant dense<0.000000e+00> : vector<2x128xf32>
    %7 = tpu.matmul %4, %6, %cst {dimension_numbers = #tpu.dot_dimension_numbers<[1], [0], [0], [1], [0, 0, 1, 1], [], []>} : vector<2x1024xbf16>, vector<1024x128xbf16>, vector<2x128xf32> -> vector<2x128xf32>
    %8 = arith.addf %5, %7 : vector<2x128xf32>
    %c0_6 = arith.constant 0 : index
    %c0_7 = arith.constant 0 : index
    %9 = vector.load %arg9[%c0_6, %c0_7] : memref<2x128xf32, #tpu.memory_space<vmem>>, vector<2x128xf32>
    tpu.vector_store %arg9[%c0_6, %c0_7], %8 {strides = array<i32>} : memref<2x128xf32, #tpu.memory_space<vmem>>, vector<2x128xf32>,
    %10 = vector.shape_cast %3 : vector<2x1024xf32> to vector<2x4x256xf32>
    %cst_8 = arith.constant dense<0xFF800000> : vector<2x4xf32>
    %11 = vector.multi_reduction <maximumf>, %10, %cst_8 [2] : vector<2x4x256xf32> to vector<2x4xf32>
    %12 = arith.index_cast %arg1 : i32 to index
    %c0_9 = arith.constant 0 : index
    %c0_10 = arith.constant 0 : index
    %13 = vector.load %arg10[%12, %c0_9, %c0_10] : memref<1x2x4xf32, #tpu.memory_space<vmem>>, vector<1x2x4xf32>
    %14 = vector.shape_cast %13 : vector<1x2x4xf32> to vector<2x4xf32>
    %15 = vector.shape_cast %11 : vector<2x4xf32> to vector<1x2x4xf32>
    tpu.vector_store %arg10[%12, %c0_9, %c0_10], %15 {strides = array<i32>} : memref<1x2x4xf32, #tpu.memory_space<vmem>>, vector<1x2x4xf32>,
    %c0_i32_11 = arith.constant 0 : i32
    %16 = arith.cmpi eq, %arg1, %c0_i32_11 : i32
    %17 = arith.extui %16 : i1 to i32
    %c0_i32_12 = arith.constant 0 : i32
    %18 = arith.cmpi ne, %17, %c0_i32_12 : i32
    scf.if %18 {
      %c0_13 = arith.constant 0 : index
      %c0_14 = arith.constant 0 : index
      %19 = vector.load %arg9[%c0_13, %c0_14] : memref<2x128xf32, #tpu.memory_space<vmem>>, vector<2x128xf32>
      %c0_15 = arith.constant 0 : index
      %c0_16 = arith.constant 0 : index
      %20 = vector.load %arg4[%c0_15, %c0_16] : memref<1x128xf32, #tpu.memory_space<vmem>>, vector<1x128xf32>
      %21 = vector.broadcast %20 : vector<1x128xf32> to vector<2x128xf32>
      %22 = arith.addf %19, %21 : vector<2x128xf32>
      %cst_17 = arith.constant 0.000000e+00 : f32
      %23 = vector.broadcast %cst_17 : f32 to vector<2x128xf32>
      %24 = arith.maximumf %22, %23 : vector<2x128xf32>
      %25 = arith.truncf %24 : vector<2x128xf32> to vector<2x128xbf16>
      %c0_18 = arith.constant 0 : index
      %c0_19 = arith.constant 0 : index
      %26 = vector.load %arg5[%c0_18, %c0_19] : memref<128x128xbf16, #tpu.memory_space<vmem>>, vector<128x128xbf16>
      %cst_20 = arith.constant dense<0.000000e+00> : vector<2x128xf32>
      %27 = tpu.matmul %25, %26, %cst_20 {dimension_numbers = #tpu.dot_dimension_numbers<[1], [0], [0], [1], [0, 0, 1, 1], [], []>} : vector<2x128xbf16>, vector<128x128xbf16>, vector<2x128xf32> -> vector<2x128xf32>
      %c0_21 = arith.constant 0 : index
      %c0_22 = arith.constant 0 : index
      %28 = vector.load %arg6[%c0_21, %c0_22] : memref<1x128xf32, #tpu.memory_space<vmem>>, vector<1x128xf32>
      %29 = vector.broadcast %28 : vector<1x128xf32> to vector<2x128xf32>
      %30 = arith.addf %27, %29 : vector<2x128xf32>
      %cst_23 = arith.constant 0.000000e+00 : f32
      %31 = vector.broadcast %cst_23 : f32 to vector<2x128xf32>
      %32 = arith.maximumf %30, %31 : vector<2x128xf32>
      %c0_24 = arith.constant 0 : index
      %c0_25 = arith.constant 0 : index
      %33 = vector.load %arg8[%c0_24, %c0_25] : memref<2x128xf32, #tpu.memory_space<vmem>>, vector<2x128xf32>
      tpu.vector_store %arg8[%c0_24, %c0_25], %32 {strides = array<i32>} : memref<2x128xf32, #tpu.memory_space<vmem>>, vector<2x128xf32>,
      %c0_26 = arith.constant 0 : index
      %c0_27 = arith.constant 0 : index
      %c0_28 = arith.constant 0 : index
      %34 = vector.load %arg10[%c0_26, %c0_27, %c0_28] : memref<1x2x4xf32, #tpu.memory_space<vmem>>, vector<1x2x4xf32>
      %35 = vector.shape_cast %34 : vector<1x2x4xf32> to vector<2x4xf32>
      %cst_29 = arith.constant 0.000000e+00 : f32
      %36 = vector.broadcast %cst_29 : f32 to vector<2x124xf32>
      %37 = tpu.concatenate %35, %36 in 1 : vector<2x4xf32>, vector<2x124xf32> -> vector<2x128xf32>
      %c0_30 = arith.constant 0 : index
      %c0_31 = arith.constant 0 : index
      %38 = vector.load %arg7[%c0_30, %c0_31] : memref<2x128xf32, #tpu.memory_space<vmem>>, vector<2x128xf32>
      tpu.vector_store %arg7[%c0_30, %c0_31], %37 {strides = array<i32>} : memref<2x128xf32, #tpu.memory_space<vmem>>, vector<2x128xf32>,
    } else {
    }
    return
  }
  func.func @transform_0(%arg0: i32, %arg1: i32) -> (i32, i32) {
    %c0_i32 = arith.constant 0 : i32
    return %arg0, %arg1 : i32, i32
  }
  func.func @transform_1(%arg0: i32, %arg1: i32) -> (i32, i32) {
    %c0_i32 = arith.constant 0 : i32
    %c0_i32_0 = arith.constant 0 : i32
    return %arg1, %c0_i32 : i32, i32
  }
  func.func @transform_2(%arg0: i32, %arg1: i32) -> (i32, i32) {
    %c0_i32 = arith.constant 0 : i32
    %c0_i32_0 = arith.constant 0 : i32
    %c0_i32_1 = arith.constant 0 : i32
    return %c0_i32, %c0_i32_0 : i32, i32
  }
  func.func @transform_3(%arg0: i32, %arg1: i32) -> (i32, i32) {
    %c0_i32 = arith.constant 0 : i32
    %c0_i32_0 = arith.constant 0 : i32
    %c0_i32_1 = arith.constant 0 : i32
    return %c0_i32, %c0_i32_0 : i32, i32
  }
  func.func @transform_4(%arg0: i32, %arg1: i32) -> (i32, i32) {
    %c0_i32 = arith.constant 0 : i32
    %c0_i32_0 = arith.constant 0 : i32
    %c0_i32_1 = arith.constant 0 : i32
    return %c0_i32, %c0_i32_0 : i32, i32
  }
  func.func @transform_5(%arg0: i32, %arg1: i32) -> (i32, i32) {
    %c0_i32 = arith.constant 0 : i32
    %c0_i32_0 = arith.constant 0 : i32
    return %arg0, %c0_i32 : i32, i32
  }
  func.func @transform_6(%arg0: i32, %arg1: i32) -> (i32, i32) {
    %c0_i32 = arith.constant 0 : i32
    %c0_i32_0 = arith.constant 0 : i32
    return %arg0, %c0_i32 : i32, i32
  }
}

module attributes {stable_mosaic.version = 11 : i64} {
  func.func @_head_pool_kernel(%arg0: i32, %arg1: i32, %arg2: memref<2x1024xf32, #tpu.memory_space<vmem>>, %arg3: memref<1024x128xbf16, #tpu.memory_space<vmem>>, %arg4: memref<1x128xf32, #tpu.memory_space<vmem>>, %arg5: memref<128x128xbf16, #tpu.memory_space<vmem>>, %arg6: memref<1x128xf32, #tpu.memory_space<vmem>>, %arg7: memref<2x128xf32, #tpu.memory_space<vmem>>, %arg8: memref<2x128xf32, #tpu.memory_space<vmem>>, %arg9: memref<2x128xf32, #tpu.memory_space<vmem>>, %arg10: memref<1x2x4xf32, #tpu.memory_space<vmem>>) attributes {dimension_semantics = [#tpu.dimension_semantics<parallel>, #tpu.dimension_semantics<arbitrary>], iteration_bounds = array<i64: 1, 1>, scalar_prefetch = 0 : i64, scratch_operands = 2 : i64, tpu.core_type = #tpu.core_type<tc>, window_params = [{transform_indices = @transform_0, window_bounds = array<i64: 2, 1024>}, {transform_indices = @transform_1, window_bounds = array<i64: 1024, 128>}, {pipeline_mode = #tpu.pipeline_mode<synchronous>, transform_indices = @transform_2, window_bounds = array<i64: 1, 128>}, {pipeline_mode = #tpu.pipeline_mode<synchronous>, transform_indices = @transform_3, window_bounds = array<i64: 128, 128>}, {pipeline_mode = #tpu.pipeline_mode<synchronous>, transform_indices = @transform_4, window_bounds = array<i64: 1, 128>}, {transform_indices = @transform_5, window_bounds = array<i64: 2, 128>}, {transform_indices = @transform_6, window_bounds = array<i64: 2, 128>}]} {
    %c0_i32 = arith.constant 0 : i32
    %0 = arith.cmpi eq, %arg1, %c0_i32 : i32
    %1 = arith.extui %0 : i1 to i32
    %c0_i32_0 = arith.constant 0 : i32
    %2 = arith.cmpi ne, %1, %c0_i32_0 : i32
    scf.if %2 {
      %cst_13 = arith.constant 0.000000e+00 : f32
      %19 = vector.broadcast %cst_13 : f32 to vector<2x128xf32>
      %c0_14 = arith.constant 0 : index
      %c0_15 = arith.constant 0 : index
      %20 = vector.load %arg9[%c0_14, %c0_15] : memref<2x128xf32, #tpu.memory_space<vmem>>, vector<2x128xf32>
      tpu.vector_store %arg9[%c0_14, %c0_15], %19 {strides = array<i32>} : memref<2x128xf32, #tpu.memory_space<vmem>>, vector<2x128xf32>,
    } else {
    }
    %c0 = arith.constant 0 : index
    %c0_1 = arith.constant 0 : index
    %3 = vector.load %arg2[%c0, %c0_1] : memref<2x1024xf32, #tpu.memory_space<vmem>>, vector<2x1024xf32>
    %4 = arith.truncf %3 : vector<2x1024xf32> to vector<2x1024xbf16>
    %c0_2 = arith.constant 0 : index
    %c0_3 = arith.constant 0 : index
    %5 = vector.load %arg9[%c0_2, %c0_3] : memref<2x128xf32, #tpu.memory_space<vmem>>, vector<2x128xf32>
    %c0_4 = arith.constant 0 : index
    %c0_5 = arith.constant 0 : index
    %6 = vector.load %arg3[%c0_4, %c0_5] : memref<1024x128xbf16, #tpu.memory_space<vmem>>, vector<1024x128xbf16>
    %cst = arith.constant dense<0.000000e+00> : vector<2x128xf32>
    %7 = tpu.matmul %4, %6, %cst {dimension_numbers = #tpu.dot_dimension_numbers<[1], [0], [0], [1], [0, 0, 1, 1], [], []>} : vector<2x1024xbf16>, vector<1024x128xbf16>, vector<2x128xf32> -> vector<2x128xf32>
    %8 = arith.addf %5, %7 : vector<2x128xf32>
    %c0_6 = arith.constant 0 : index
    %c0_7 = arith.constant 0 : index
    %9 = vector.load %arg9[%c0_6, %c0_7] : memref<2x128xf32, #tpu.memory_space<vmem>>, vector<2x128xf32>
    tpu.vector_store %arg9[%c0_6, %c0_7], %8 {strides = array<i32>} : memref<2x128xf32, #tpu.memory_space<vmem>>, vector<2x128xf32>,
    %10 = vector.shape_cast %3 : vector<2x1024xf32> to vector<2x4x256xf32>
    %cst_8 = arith.constant dense<0xFF800000> : vector<2x4xf32>
    %11 = vector.multi_reduction <maximumf>, %10, %cst_8 [2] : vector<2x4x256xf32> to vector<2x4xf32>
    %12 = arith.index_cast %arg1 : i32 to index
    %c0_9 = arith.constant 0 : index
    %c0_10 = arith.constant 0 : index
    %13 = vector.load %arg10[%12, %c0_9, %c0_10] : memref<1x2x4xf32, #tpu.memory_space<vmem>>, vector<1x2x4xf32>
    %14 = vector.shape_cast %13 : vector<1x2x4xf32> to vector<2x4xf32>
    %15 = vector.shape_cast %11 : vector<2x4xf32> to vector<1x2x4xf32>
    tpu.vector_store %arg10[%12, %c0_9, %c0_10], %15 {strides = array<i32>} : memref<1x2x4xf32, #tpu.memory_space<vmem>>, vector<1x2x4xf32>,
    %c0_i32_11 = arith.constant 0 : i32
    %16 = arith.cmpi eq, %arg1, %c0_i32_11 : i32
    %17 = arith.extui %16 : i1 to i32
    %c0_i32_12 = arith.constant 0 : i32
    %18 = arith.cmpi ne, %17, %c0_i32_12 : i32
    scf.if %18 {
      %c0_13 = arith.constant 0 : index
      %c0_14 = arith.constant 0 : index
      %19 = vector.load %arg9[%c0_13, %c0_14] : memref<2x128xf32, #tpu.memory_space<vmem>>, vector<2x128xf32>
      %c0_15 = arith.constant 0 : index
      %c0_16 = arith.constant 0 : index
      %20 = vector.load %arg4[%c0_15, %c0_16] : memref<1x128xf32, #tpu.memory_space<vmem>>, vector<1x128xf32>
      %21 = vector.broadcast %20 : vector<1x128xf32> to vector<2x128xf32>
      %22 = arith.addf %19, %21 : vector<2x128xf32>
      %cst_17 = arith.constant 0.000000e+00 : f32
      %23 = vector.broadcast %cst_17 : f32 to vector<2x128xf32>
      %24 = arith.maximumf %22, %23 : vector<2x128xf32>
      %25 = arith.truncf %24 : vector<2x128xf32> to vector<2x128xbf16>
      %c0_18 = arith.constant 0 : index
      %c0_19 = arith.constant 0 : index
      %26 = vector.load %arg5[%c0_18, %c0_19] : memref<128x128xbf16, #tpu.memory_space<vmem>>, vector<128x128xbf16>
      %cst_20 = arith.constant dense<0.000000e+00> : vector<2x128xf32>
      %27 = tpu.matmul %25, %26, %cst_20 {dimension_numbers = #tpu.dot_dimension_numbers<[1], [0], [0], [1], [0, 0, 1, 1], [], []>} : vector<2x128xbf16>, vector<128x128xbf16>, vector<2x128xf32> -> vector<2x128xf32>
      %c0_21 = arith.constant 0 : index
      %c0_22 = arith.constant 0 : index
      %28 = vector.load %arg6[%c0_21, %c0_22] : memref<1x128xf32, #tpu.memory_space<vmem>>, vector<1x128xf32>
      %29 = vector.broadcast %28 : vector<1x128xf32> to vector<2x128xf32>
      %30 = arith.addf %27, %29 : vector<2x128xf32>
      %cst_23 = arith.constant 0.000000e+00 : f32
      %31 = vector.broadcast %cst_23 : f32 to vector<2x128xf32>
      %32 = arith.maximumf %30, %31 : vector<2x128xf32>
      %c0_24 = arith.constant 0 : index
      %c0_25 = arith.constant 0 : index
      %33 = vector.load %arg8[%c0_24, %c0_25] : memref<2x128xf32, #tpu.memory_space<vmem>>, vector<2x128xf32>
      tpu.vector_store %arg8[%c0_24, %c0_25], %32 {strides = array<i32>} : memref<2x128xf32, #tpu.memory_space<vmem>>, vector<2x128xf32>,
      %c0_26 = arith.constant 0 : index
      %c0_27 = arith.constant 0 : index
      %c0_28 = arith.constant 0 : index
      %34 = vector.load %arg10[%c0_26, %c0_27, %c0_28] : memref<1x2x4xf32, #tpu.memory_space<vmem>>, vector<1x2x4xf32>
      %35 = vector.shape_cast %34 : vector<1x2x4xf32> to vector<2x4xf32>
      %cst_29 = arith.constant 0.000000e+00 : f32
      %36 = vector.broadcast %cst_29 : f32 to vector<2x124xf32>
      %37 = tpu.concatenate %35, %36 in 1 : vector<2x4xf32>, vector<2x124xf32> -> vector<2x128xf32>
      %c0_30 = arith.constant 0 : index
      %c0_31 = arith.constant 0 : index
      %38 = vector.load %arg7[%c0_30, %c0_31] : memref<2x128xf32, #tpu.memory_space<vmem>>, vector<2x128xf32>
      tpu.vector_store %arg7[%c0_30, %c0_31], %37 {strides = array<i32>} : memref<2x128xf32, #tpu.memory_space<vmem>>, vector<2x128xf32>,
    } else {
    }
    return
  }
  func.func @transform_0(%arg0: i32, %arg1: i32) -> (i32, i32) {
    %c0_i32 = arith.constant 0 : i32
    return %arg0, %arg1 : i32, i32
  }
  func.func @transform_1(%arg0: i32, %arg1: i32) -> (i32, i32) {
    %c0_i32 = arith.constant 0 : i32
    %c0_i32_0 = arith.constant 0 : i32
    return %arg1, %c0_i32 : i32, i32
  }
  func.func @transform_2(%arg0: i32, %arg1: i32) -> (i32, i32) {
    %c0_i32 = arith.constant 0 : i32
    %c0_i32_0 = arith.constant 0 : i32
    %c0_i32_1 = arith.constant 0 : i32
    return %c0_i32, %c0_i32_0 : i32, i32
  }
  func.func @transform_3(%arg0: i32, %arg1: i32) -> (i32, i32) {
    %c0_i32 = arith.constant 0 : i32
    %c0_i32_0 = arith.constant 0 : i32
    %c0_i32_1 = arith.constant 0 : i32
    return %c0_i32, %c0_i32_0 : i32, i32
  }
  func.func @transform_4(%arg0: i32, %arg1: i32) -> (i32, i32) {
    %c0_i32 = arith.constant 0 : i32
    %c0_i32_0 = arith.constant 0 : i32
    %c0_i32_1 = arith.constant 0 : i32
    return %c0_i32, %c0_i32_0 : i32, i32
  }
  func.func @transform_5(%arg0: i32, %arg1: i32) -> (i32, i32) {
    %c0_i32 = arith.constant 0 : i32
    %c0_i32_0 = arith.constant 0 : i32
    return %arg0, %c0_i32 : i32, i32
  }
  func.func @transform_6(%arg0: i32, %arg1: i32) -> (i32, i32) {
    %c0_i32 = arith.constant 0 : i32
    %c0_i32_0 = arith.constant 0 : i32
    return %arg0, %c0_i32 : i32, i32
  }
}

</mosaic_0001>

<llo_original>
// kernel: tpu_custom_call.1
$region0: #{tpu_custom_call.1}
  #allocation0 [shape = 'u32[]', space=smem, size = 0x4, offset = 0x4, fixed_abs, tag = 'smem constant byte address 0x4 - core index']
  #allocation1 [shape = 'u32[144,128]{1,0:T(1,128)}', space=vmem, size = 0x12000, scoped, tag = 'internal scratch']
  #allocation2 [shape = 'f32[2,128]{1,0:T(2,128)}', space=vmem, size = 0x400, scoped, tag = 'scratch operand']
  #allocation3 [shape = 'f32[1,2,4]{2,1,0:T(2,128)}', space=vmem, size = 0x400, scoped, tag = 'scratch operand']
  %s0 = inlined_call_operand.hbm [shape: f32[2,1024], index: 0, kind: input, shape index: {}]
  %s1 = inlined_call_operand.hbm [shape: bf16[1024,128], index: 1, kind: input, shape index: {}]
  %s2 = inlined_call_operand.vmem [shape: f32[1,128], index: 2, kind: input, shape index: {}]
  %s3 = inlined_call_operand.hbm [shape: bf16[128,128], index: 3, kind: input, shape index: {}]
  %s4 = inlined_call_operand.vmem [shape: f32[1,128], index: 4, kind: input, shape index: {}]
  %s5 = inlined_call_operand.hbm [shape: f32[2,128], index: 5, kind: output, shape index: {0}]
  %s6 = inlined_call_operand.hbm [shape: f32[2,128], index: 6, kind: output, shape index: {1}]
  %7 = xla_tuple %s5, %s6
  %s8 = sld [smem:[#allocation0]]
  $region58: #{tpu_custom_call.1} parent=0
    _
  %s10 = ssub.s32 1, %s8
  %s11 = scalar_select 0, %s10, %s8
  $region1: #{tpu_custom_call.1} parent=0
    #allocation4 [shape = 'u8[8192]{0}', space=vmem, size = 0x2000, scoped, tag = 'input window, operand 0, single buffered']
    #allocation5 [shape = 's32[1]{0}', space=sflag, size = 0x4, scoped, tag = 'scoped memory for tpu_custom_call.1']
    #allocation6 [shape = 's32[1]{0}', space=sflag, size = 0x4, scoped, tag = 'scoped memory for tpu_custom_call.1']
    #allocation7 [shape = 'u8[262144]{0}', space=vmem, size = 0x40000, scoped, tag = 'input window, operand 1, single buffered']
    #allocation8 [shape = 's32[1]{0}', space=sflag, size = 0x4, scoped, tag = 'scoped memory for tpu_custom_call.1']
    #allocation9 [shape = 'u8[32768]{0}', space=vmem, size = 0x8000, scoped, tag = 'input window, operand 3, single buffered']
    #allocation10 [shape = 'u8[1024]{0}', space=vmem, size = 0x400, scoped, tag = 'output window, operand 0, single buffered']
    #allocation11 [shape = 'u8[1024]{0}', space=vmem, size = 0x400, scoped, tag = 'output window, operand 1, single buffered']
    #allocation12 [shape = 's32[1]{0}', space=sflag, size = 0x4, scoped, tag = 'scoped memory for tpu_custom_call.1']
    %12 = vsyncpa [#allocation5], 0
    %13 = vsyncpa [#allocation8], 0
    %14 = vsyncpa [#allocation6], 0
    %15 = vsyncpa [#allocation12], 0
    // Predicated region
    $region2: #{tpu_custom_call.1} parent=1 // pred_check
      _
    $region3: #{tpu_custom_call.1} parent=1 // pred_check_branch
      %17 = sbr.rel (0) target = $region5
    $region4: #{tpu_custom_call.1} parent=1 // pred_region
      %s19 = ssub.s32 256, 256
      %20 = vsyncadd [#allocation5], %s19
      %s22 = sshll.u32 [#allocation4], 4
      %s23 = int_to_ptr.vmem [resolvable:$true] %s22
      %25 = dma.hbm_to_vmem [thread:$0]  %s0, 256, %s23, [#allocation5]
    $region5: #{tpu_custom_call.1} parent=1 // pred_fallthru
      _
    // Predicated region
    $region6: #{tpu_custom_call.1} parent=1 // pred_check
      _
    $region7: #{tpu_custom_call.1} parent=1 // pred_check_branch
      %27 = sbr.rel (0) target = $region9
    $region8: #{tpu_custom_call.1} parent=1 // pred_region
      %s29 = ssub.s32 8192, 8192
      %30 = vsyncadd [#allocation8], %s29
      %s31 = sshll.u32 [#allocation7], 4
      %s32 = int_to_ptr.vmem [resolvable:$true] %s31
      %37 = dma.hbm_to_vmem [thread:$0]  %s1, 8192, %s32, [#allocation8], 64, 64, 4
    $region9: #{tpu_custom_call.1} parent=1 // pred_fallthru
      _
    // Predicated region
    $region10: #{tpu_custom_call.1} parent=1 // pred_check
      _
    $region11: #{tpu_custom_call.1} parent=1 // pred_check_branch
      %39 = sbr.rel (0) target = $region13
    $region12: #{tpu_custom_call.1} parent=1 // pred_region
      _
    $region13: #{tpu_custom_call.1} parent=1 // pred_fallthru
      _
    // Predicated region
    $region14: #{tpu_custom_call.1} parent=1 // pred_check
      _
    $region15: #{tpu_custom_call.1} parent=1 // pred_check_branch
      %41 = sbr.rel (0) target = $region17
    $region16: #{tpu_custom_call.1} parent=1 // pred_region
      %s43 = ssub.s32 1024, 1024
      %44 = vsyncadd [#allocation8], %s43
      %s45 = sshll.u32 [#allocation9], 4
      %s46 = int_to_ptr.vmem [resolvable:$true] %s45
      %51 = dma.hbm_to_vmem [thread:$0]  %s3, 1024, %s46, [#allocation8], 64, 64, 4
    $region17: #{tpu_custom_call.1} parent=1 // pred_fallthru
      _
    // Predicated region
    $region18: #{tpu_custom_call.1} parent=1 // pred_check
      _
    $region19: #{tpu_custom_call.1} parent=1 // pred_check_branch
      %53 = sbr.rel (0) target = $region21
    $region20: #{tpu_custom_call.1} parent=1 // pred_region
      _
    $region21: #{tpu_custom_call.1} parent=1 // pred_fallthru
      _
    // Predicated region
    $region22: #{tpu_custom_call.1} parent=1 // pred_check
      _
    $region23: #{tpu_custom_call.1} parent=1 // pred_check_branch
      %55 = sbr.rel (0) target = $region25
    $region24: #{tpu_custom_call.1} parent=1 // pred_region
      %56 = dma.done [#allocation5], 256
    $region25: #{tpu_custom_call.1} parent=1 // pred_fallthru
      _
    // Predicated region
    $region26: #{tpu_custom_call.1} parent=1 // pred_check
      _
    $region27: #{tpu_custom_call.1} parent=1 // pred_check_branch
      %58 = sbr.rel (0) target = $region29
    $region28: #{tpu_custom_call.1} parent=1 // pred_region
      %59 = dma.done [#allocation8], 8192
    $region29: #{tpu_custom_call.1} parent=1 // pred_fallthru
      _
    // Predicated region
    $region30: #{tpu_custom_call.1} parent=1 // pred_check
      _
    $region31: #{tpu_custom_call.1} parent=1 // pred_check_branch
      %61 = sbr.rel (0) target = $region33
    $region32: #{tpu_custom_call.1} parent=1 // pred_region
      %62 = dma.done [#allocation8], 1024
    $region33: #{tpu_custom_call.1} parent=1 // pred_fallthru
      _
    %p64 = scmp.eq.s32.totalorder 0, 0
    // Predicated region
    $region34: #{tpu_custom_call.1} parent=1 // pred_check
      %p65 = pneg %p64
    $region35: #{tpu_custom_call.1} parent=1 // pred_check_branch
      %67 = sbr.rel (%p65) target = $region37
    $region36: #{tpu_custom_call.1} parent=1 // pred_region
      %68 = vst [vmem:[#allocation2] sm:$0x3] 0.0
    $region37: #{tpu_custom_call.1} parent=1 // pred_fallthru
      _
    %v69 = vld [vmem:[#allocation4] sm:$0xff]
    %v70 = vld [vmem:[#allocation4 + $0x8] sm:$0xff]
    %v73 = vcombine.high %v69, %v69
    %v75 = vunpack.c.l.s4 1983009808
    %v76 = vunpack.c.0.s8 %v75
    %v77 = vlaneseq
    %v78 = vshrl.u32 %v77, 7
    %v79 = vsub.s32 %v76, %v78
    %v80 = vrot.slane %v69, %v79
    %v82 = vunpack.c.l.s4 1983009808
    %v83 = vunpack.c.0.s8 %v82
    %v84 = vlaneseq
    %v85 = vshrl.u32 %v84, 7
    %v86 = vsub.s32 %v83, %v85
    %v87 = vrot.slane %v73, %v86
    %v88 = vcombine.high %v80, %v80
    %v89 = vcombine.high %v87, %v87
    %v90 = vcombine.high %v70, %v70
    %v92 = vunpack.c.l.s4 1983009808
    %v93 = vunpack.c.0.s8 %v92
    %v94 = vlaneseq
    %v95 = vshrl.u32 %v94, 7
    %v96 = vsub.s32 %v93, %v95
    %v97 = vrot.slane %v70, %v96
    %v99 = vunpack.c.l.s4 1983009808
    %v100 = vunpack.c.0.s8 %v99
    %v101 = vlaneseq
    %v102 = vshrl.u32 %v101, 7
    %v103 = vsub.s32 %v100, %v102
    %v104 = vrot.slane %v90, %v103
    %v105 = vcombine.high %v97, %v97
    %v106 = vcombine.high %v104, %v104
    %v115 = vpack.c.bf16 %v80, %v80
    %v116 = vpack.c.bf16 %v88, %v88
    %v117 = vpack.c.bf16 %v87, %v87
    %v118 = vpack.c.bf16 %v89, %v89
    %v119 = vpack.c.bf16 %v97, %v97
    %v120 = vpack.c.bf16 %v105, %v105
    %v121 = vpack.c.bf16 %v104, %v104
    %v122 = vpack.c.bf16 %v106, %v106
    %v123 = vld [vmem:[#allocation2] sm:$0x3]
    %v124 = vld [vmem:[#allocation7] sm:$0xf]
    %v125 = vld [vmem:[#allocation7 + $0x4] sm:$0xf]
    %v126 = vld [vmem:[#allocation7 + $0x8] sm:$0xf]
    %v127 = vld [vmem:[#allocation7 + $0xc] sm:$0xf]
    %v128 = vld [vmem:[#allocation7 + $0x10] sm:$0xf]
    %v129 = vld [vmem:[#allocation7 + $0x14] sm:$0xf]
    %v130 = vld [vmem:[#allocation7 + $0x18] sm:$0xf]
    %v131 = vld [vmem:[#allocation7 + $0x1c] sm:$0xf]
    %v132 = vld [vmem:[#allocation7 + $0x20] sm:$0xf]
    %v133 = vld [vmem:[#allocation7 + $0x24] sm:$0xf]
    %v134 = vld [vmem:[#allocation7 + $0x28] sm:$0xf]
    %v135 = vld [vmem:[#allocation7 + $0x2c] sm:$0xf]
    %v136 = vld [vmem:[#allocation7 + $0x30] sm:$0xf]
    %v137 = vld [vmem:[#allocation7 + $0x34] sm:$0xf]
    %v138 = vld [vmem:[#allocation7 + $0x38] sm:$0xf]
    %v139 = vld [vmem:[#allocation7 + $0x3c] sm:$0xf]
    %v140 = vld [vmem:[#allocation7 + $0x40] sm:$0xf]
    %v141 = vld [vmem:[#allocation7 + $0x44] sm:$0xf]
    %v142 = vld [vmem:[#allocation7 + $0x48] sm:$0xf]
    %v143 = vld [vmem:[#allocation7 + $0x4c] sm:$0xf]
    %v144 = vld [vmem:[#allocation7 + $0x50] sm:$0xf]
    %v145 = vld [vmem:[#allocation7 + $0x54] sm:$0xf]
    %v146 = vld [vmem:[#allocation7 + $0x58] sm:$0xf]
    %v147 = vld [vmem:[#allocation7 + $0x5c] sm:$0xf]
    %v148 = vld [vmem:[#allocation7 + $0x60] sm:$0xf]
    %v149 = vld [vmem:[#allocation7 + $0x64] sm:$0xf]
    %v150 = vld [vmem:[#allocation7 + $0x68] sm:$0xf]
    %v151 = vld [vmem:[#allocation7 + $0x6c] sm:$0xf]
    %v152 = vld [vmem:[#allocation7 + $0x70] sm:$0xf]
    %v153 = vld [vmem:[#allocation7 + $0x74] sm:$0xf]
    %v154 = vld [vmem:[#allocation7 + $0x78] sm:$0xf]
    %v155 = vld [vmem:[#allocation7 + $0x7c] sm:$0xf]
    %v156 = vld [vmem:[#allocation7 + $0x80] sm:$0xf]
    %v157 = vld [vmem:[#allocation7 + $0x84] sm:$0xf]
    %v158 = vld [vmem:[#allocation7 + $0x88] sm:$0xf]
    %v159 = vld [vmem:[#allocation7 + $0x8c] sm:$0xf]
    %v160 = vld [vmem:[#allocation7 + $0x90] sm:$0xf]
    %v161 = vld [vmem:[#allocation7 + $0x94] sm:$0xf]
    %v162 = vld [vmem:[#allocation7 + $0x98] sm:$0xf]
    %v163 = vld [vmem:[#allocation7 + $0x9c] sm:$0xf]
    %v164 = vld [vmem:[#allocation7 + $0xa0] sm:$0xf]
    %v165 = vld [vmem:[#allocation7 + $0xa4] sm:$0xf]
    %v166 = vld [vmem:[#allocation7 + $0xa8] sm:$0xf]
    %v167 = vld [vmem:[#allocation7 + $0xac] sm:$0xf]
    %v168 = vld [vmem:[#allocation7 + $0xb0] sm:$0xf]
    %v169 = vld [vmem:[#allocation7 + $0xb4] sm:$0xf]
    %v170 = vld [vmem:[#allocation7 + $0xb8] sm:$0xf]
    %v171 = vld [vmem:[#allocation7 + $0xbc] sm:$0xf]
    %v172 = vld [vmem:[#allocation7 + $0xc0] sm:$0xf]
    %v173 = vld [vmem:[#allocation7 + $0xc4] sm:$0xf]
    %v174 = vld [vmem:[#allocation7 + $0xc8] sm:$0xf]
    %v175 = vld [vmem:[#allocation7 + $0xcc] sm:$0xf]
    %v176 = vld [vmem:[#allocation7 + $0xd0] sm:$0xf]
    %v177 = vld [vmem:[#allocation7 + $0xd4] sm:$0xf]
    %v178 = vld [vmem:[#allocation7 + $0xd8] sm:$0xf]
    %v179 = vld [vmem:[#allocation7 + $0xdc] sm:$0xf]
    %v180 = vld [vmem:[#allocation7 + $0xe0] sm:$0xf]
    %v181 = vld [vmem:[#allocation7 + $0xe4] sm:$0xf]
    %v182 = vld [vmem:[#allocation7 + $0xe8] sm:$0xf]
    %v183 = vld [vmem:[#allocation7 + $0xec] sm:$0xf]
    %v184 = vld [vmem:[#allocation7 + $0xf0] sm:$0xf]
    %v185 = vld [vmem:[#allocation7 + $0xf4] sm:$0xf]
    %v186 = vld [vmem:[#allocation7 + $0xf8] sm:$0xf]
    %v187 = vld [vmem:[#allocation7 + $0xfc] sm:$0xf]
    %v188 = vld [vmem:[#allocation7 + $0x100] sm:$0xf]
    %v189 = vld [vmem:[#allocation7 + $0x104] sm:$0xf]
    %v190 = vld [vmem:[#allocation7 + $0x108] sm:$0xf]
    %v191 = vld [vmem:[#allocation7 + $0x10c] sm:$0xf]
    %v192 = vld [vmem:[#allocation7 + $0x110] sm:$0xf]
    %v193 = vld [vmem:[#allocation7 + $0x114] sm:$0xf]
    %v194 = vld [vmem:[#allocation7 + $0x118] sm:$0xf]
    %v195 = vld [vmem:[#allocation7 + $0x11c] sm:$0xf]
    %v196 = vld [vmem:[#allocation7 + $0x120] sm:$0xf]
    %v197 = vld [vmem:[#allocation7 + $0x124] sm:$0xf]
    %v198 = vld [vmem:[#allocation7 + $0x128] sm:$0xf]
    %v199 = vld [vmem:[#allocation7 + $0x12c] sm:$0xf]
    %v200 = vld [vmem:[#allocation7 + $0x130] sm:$0xf]
    %v201 = vld [vmem:[#allocation7 + $0x134] sm:$0xf]
    %v202 = vld [vmem:[#allocation7 + $0x138] sm:$0xf]
    %v203 = vld [vmem:[#allocation7 + $0x13c] sm:$0xf]
    %v204 = vld [vmem:[#allocation7 + $0x140] sm:$0xf]
    %v205 = vld [vmem:[#allocation7 + $0x144] sm:$0xf]
    %v206 = vld [vmem:[#allocation7 + $0x148] sm:$0xf]
    %v207 = vld [vmem:[#allocation7 + $0x14c] sm:$0xf]
    %v208 = vld [vmem:[#allocation7 + $0x150] sm:$0xf]
    %v209 = vld [vmem:[#allocation7 + $0x154] sm:$0xf]
    %v210 = vld [vmem:[#allocation7 + $0x158] sm:$0xf]
    %v211 = vld [vmem:[#allocation7 + $0x15c] sm:$0xf]
    %v212 = vld [vmem:[#allocation7 + $0x160] sm:$0xf]
    %v213 = vld [vmem:[#allocation7 + $0x164] sm:$0xf]
    %v214 = vld [vmem:[#allocation7 + $0x168] sm:$0xf]
    %v215 = vld [vmem:[#allocation7 + $0x16c] sm:$0xf]
    %v216 = vld [vmem:[#allocation7 + $0x170] sm:$0xf]
    %v217 = vld [vmem:[#allocation7 + $0x174] sm:$0xf]
    %v218 = vld [vmem:[#allocation7 + $0x178] sm:$0xf]
    %v219 = vld [vmem:[#allocation7 + $0x17c] sm:$0xf]
    %v220 = vld [vmem:[#allocation7 + $0x180] sm:$0xf]
    %v221 = vld [vmem:[#allocation7 + $0x184] sm:$0xf]
    %v222 = vld [vmem:[#allocation7 + $0x188] sm:$0xf]
    %v223 = vld [vmem:[#allocation7 + $0x18c] sm:$0xf]
    %v224 = vld [vmem:[#allocation7 + $0x190] sm:$0xf]
    %v225 = vld [vmem:[#allocation7 + $0x194] sm:$0xf]
    %v226 = vld [vmem:[#allocation7 + $0x198] sm:$0xf]
    %v227 = vld [vmem:[#allocation7 + $0x19c] sm:$0xf]
    %v228 = vld [vmem:[#allocation7 + $0x1a0] sm:$0xf]
    %v229 = vld [vmem:[#allocation7 + $0x1a4] sm:$0xf]
    %v230 = vld [vmem:[#allocation7 + $0x1a8] sm:$0xf]
    %v231 = vld [vmem:[#allocation7 + $0x1ac] sm:$0xf]
    %v232 = vld [vmem:[#allocation7 + $0x1b0] sm:$0xf]
    %v233 = vld [vmem:[#allocation7 + $0x1b4] sm:$0xf]
    %v234 = vld [vmem:[#allocation7 + $0x1b8] sm:$0xf]
    %v235 = vld [vmem:[#allocation7 + $0x1bc] sm:$0xf]
    %v236 = vld [vmem:[#allocation7 + $0x1c0] sm:$0xf]
    %v237 = vld [vmem:[#allocation7 + $0x1c4] sm:$0xf]
    %v238 = vld [vmem:[#allocation7 + $0x1c8] sm:$0xf]
    %v239 = vld [vmem:[#allocation7 + $0x1cc] sm:$0xf]
    %v240 = vld [vmem:[#allocation7 + $0x1d0] sm:$0xf]
    %v241 = vld [vmem:[#allocation7 + $0x1d4] sm:$0xf]
    %v242 = vld [vmem:[#allocation7 + $0x1d8] sm:$0xf]
    %v243 = vld [vmem:[#allocation7 + $0x1dc] sm:$0xf]
    %v244 = vld [vmem:[#allocation7 + $0x1e0] sm:$0xf]
    %v245 = vld [vmem:[#allocation7 + $0x1e4] sm:$0xf]
    %v246 = vld [vmem:[#allocation7 + $0x1e8] sm:$0xf]
    %v247 = vld [vmem:[#allocation7 + $0x1ec] sm:$0xf]
    %v248 = vld [vmem:[#allocation7 + $0x1f0] sm:$0xf]
    %v249 = vld [vmem:[#allocation7 + $0x1f4] sm:$0xf]
    %v250 = vld [vmem:[#allocation7 + $0x1f8] sm:$0xf]
    %v251 = vld [vmem:[#allocation7 + $0x1fc] sm:$0xf]
    %v380 = vunpack.c.l.b16 %v124
    %v381 = vunpack.c.l.b16 %v125
    %v382 = vunpack.c.l.b16 %v126
    %v383 = vunpack.c.l.b16 %v127
    %v384 = vunpack.c.l.b16 %v128
    %v385 = vunpack.c.l.b16 %v129
    %v386 = vunpack.c.l.b16 %v130
    %v387 = vunpack.c.l.b16 %v131
    %v388 = vunpack.c.l.b16 %v132
    %v389 = vunpack.c.l.b16 %v133
    %v390 = vunpack.c.l.b16 %v134
    %v391 = vunpack.c.l.b16 %v135
    %v392 = vunpack.c.l.b16 %v136
    %v393 = vunpack.c.l.b16 %v137
    %v394 = vunpack.c.l.b16 %v138
    %v395 = vunpack.c.l.b16 %v139
    %v396 = vunpack.c.l.b16 %v140
    %v397 = vunpack.c.l.b16 %v141
    %v398 = vunpack.c.l.b16 %v142
    %v399 = vunpack.c.l.b16 %v143
    %v400 = vunpack.c.l.b16 %v144
    %v401 = vunpack.c.l.b16 %v145
    %v402 = vunpack.c.l.b16 %v146
    %v403 = vunpack.c.l.b16 %v147
    %v404 = vunpack.c.l.b16 %v148
    %v405 = vunpack.c.l.b16 %v149
    %v406 = vunpack.c.l.b16 %v150
    %v407 = vunpack.c.l.b16 %v151
    %v408 = vunpack.c.l.b16 %v152
    %v409 = vunpack.c.l.b16 %v153
    %v410 = vunpack.c.l.b16 %v154
    %v411 = vunpack.c.l.b16 %v155
    %v412 = vunpack.c.l.b16 %v156
    %v413 = vunpack.c.l.b16 %v157
    %v414 = vunpack.c.l.b16 %v158
    %v415 = vunpack.c.l.b16 %v159
    %v416 = vunpack.c.l.b16 %v160
    %v417 = vunpack.c.l.b16 %v161
    %v418 = vunpack.c.l.b16 %v162
    %v419 = vunpack.c.l.b16 %v163
    %v420 = vunpack.c.l.b16 %v164
    %v421 = vunpack.c.l.b16 %v165
    %v422 = vunpack.c.l.b16 %v166
    %v423 = vunpack.c.l.b16 %v167
    %v424 = vunpack.c.l.b16 %v168
    %v425 = vunpack.c.l.b16 %v169
    %v426 = vunpack.c.l.b16 %v170
    %v427 = vunpack.c.l.b16 %v171
    %v428 = vunpack.c.l.b16 %v172
    %v429 = vunpack.c.l.b16 %v173
    %v430 = vunpack.c.l.b16 %v174
    %v431 = vunpack.c.l.b16 %v175
    %v432 = vunpack.c.l.b16 %v176
    %v433 = vunpack.c.l.b16 %v177
    %v434 = vunpack.c.l.b16 %v178
    %v435 = vunpack.c.l.b16 %v179
    %v436 = vunpack.c.l.b16 %v180
    %v437 = vunpack.c.l.b16 %v181
    %v438 = vunpack.c.l.b16 %v182
    %v439 = vunpack.c.l.b16 %v183
    %v440 = vunpack.c.l.b16 %v184
    %v441 = vunpack.c.l.b16 %v185
    %v442 = vunpack.c.l.b16 %v186
    %v443 = vunpack.c.l.b16 %v187
    %v444 = vunpack.c.l.b16 %v188
    %v445 = vunpack.c.l.b16 %v189
    %v446 = vunpack.c.l.b16 %v190
    %v447 = vunpack.c.l.b16 %v191
    %v448 = vunpack.c.l.b16 %v192
    %v449 = vunpack.c.l.b16 %v193
    %v450 = vunpack.c.l.b16 %v194
    %v451 = vunpack.c.l.b16 %v195
    %v452 = vunpack.c.l.b16 %v196
    %v453 = vunpack.c.l.b16 %v197
    %v454 = vunpack.c.l.b16 %v198
    %v455 = vunpack.c.l.b16 %v199
    %v456 = vunpack.c.l.b16 %v200
    %v457 = vunpack.c.l.b16 %v201
    %v458 = vunpack.c.l.b16 %v202
    %v459 = vunpack.c.l.b16 %v203
    %v460 = vunpack.c.l.b16 %v204
    %v461 = vunpack.c.l.b16 %v205
    %v462 = vunpack.c.l.b16 %v206
    %v463 = vunpack.c.l.b16 %v207
    %v464 = vunpack.c.l.b16 %v208
    %v465 = vunpack.c.l.b16 %v209
    %v466 = vunpack.c.l.b16 %v210
    %v467 = vunpack.c.l.b16 %v211
    %v468 = vunpack.c.l.b16 %v212
    %v469 = vunpack.c.l.b16 %v213
    %v470 = vunpack.c.l.b16 %v214
    %v471 = vunpack.c.l.b16 %v215
    %v472 = vunpack.c.l.b16 %v216
    %v473 = vunpack.c.l.b16 %v217
    %v474 = vunpack.c.l.b16 %v218
    %v475 = vunpack.c.l.b16 %v219
    %v476 = vunpack.c.l.b16 %v220
    %v477 = vunpack.c.l.b16 %v221
    %v478 = vunpack.c.l.b16 %v222
    %v479 = vunpack.c.l.b16 %v223
    %v480 = vunpack.c.l.b16 %v224
    %v481 = vunpack.c.l.b16 %v225
    %v482 = vunpack.c.l.b16 %v226
    %v483 = vunpack.c.l.b16 %v227
    %v484 = vunpack.c.l.b16 %v228
    %v485 = vunpack.c.l.b16 %v229
    %v486 = vunpack.c.l.b16 %v230
    %v487 = vunpack.c.l.b16 %v231
    %v488 = vunpack.c.l.b16 %v232
    %v489 = vunpack.c.l.b16 %v233
    %v490 = vunpack.c.l.b16 %v234
    %v491 = vunpack.c.l.b16 %v235
    %v492 = vunpack.c.l.b16 %v236
    %v493 = vunpack.c.l.b16 %v237
    %v494 = vunpack.c.l.b16 %v238
    %v495 = vunpack.c.l.b16 %v239
    %v496 = vunpack.c.l.b16 %v240
    %v497 = vunpack.c.l.b16 %v241
    %v498 = vunpack.c.l.b16 %v242
    %v499 = vunpack.c.l.b16 %v243
    %v500 = vunpack.c.l.b16 %v244
    %v501 = vunpack.c.l.b16 %v245
    %v502 = vunpack.c.l.b16 %v246
    %v503 = vunpack.c.l.b16 %v247
    %v504 = vunpack.c.l.b16 %v248
    %v505 = vunpack.c.l.b16 %v249
    %v506 = vunpack.c.l.b16 %v250
    %v507 = vunpack.c.l.b16 %v251
    %v508 = vpack.c.b16 %v381, %v380
    %v509 = vpack.c.b16 %v383, %v382
    %v510 = vpack.c.b16 %v385, %v384
    %v511 = vpack.c.b16 %v387, %v386
    %v512 = vpack.c.b16 %v389, %v388
    %v513 = vpack.c.b16 %v391, %v390
    %v514 = vpack.c.b16 %v393, %v392
    %v515 = vpack.c.b16 %v395, %v394
    %v516 = vpack.c.b16 %v397, %v396
    %v517 = vpack.c.b16 %v399, %v398
    %v518 = vpack.c.b16 %v401, %v400
    %v519 = vpack.c.b16 %v403, %v402
    %v520 = vpack.c.b16 %v405, %v404
    %v521 = vpack.c.b16 %v407, %v406
    %v522 = vpack.c.b16 %v409, %v408
    %v523 = vpack.c.b16 %v411, %v410
    %v524 = vpack.c.b16 %v413, %v412
    %v525 = vpack.c.b16 %v415, %v414
    %v526 = vpack.c.b16 %v417, %v416
    %v527 = vpack.c.b16 %v419, %v418
    %v528 = vpack.c.b16 %v421, %v420
    %v529 = vpack.c.b16 %v423, %v422
    %v530 = vpack.c.b16 %v425, %v424
    %v531 = vpack.c.b16 %v427, %v426
    %v532 = vpack.c.b16 %v429, %v428
    %v533 = vpack.c.b16 %v431, %v430
    %v534 = vpack.c.b16 %v433, %v432
    %v535 = vpack.c.b16 %v435, %v434
    %v536 = vpack.c.b16 %v437, %v436
    %v537 = vpack.c.b16 %v439, %v438
    %v538 = vpack.c.b16 %v441, %v440
    %v539 = vpack.c.b16 %v443, %v442
    %v540 = vpack.c.b16 %v445, %v444
    %v541 = vpack.c.b16 %v447, %v446
    %v542 = vpack.c.b16 %v449, %v448
    %v543 = vpack.c.b16 %v451, %v450
    %v544 = vpack.c.b16 %v453, %v452
    %v545 = vpack.c.b16 %v455, %v454
    %v546 = vpack.c.b16 %v457, %v456
    %v547 = vpack.c.b16 %v459, %v458
    %v548 = vpack.c.b16 %v461, %v460
    %v549 = vpack.c.b16 %v463, %v462
    %v550 = vpack.c.b16 %v465, %v464
    %v551 = vpack.c.b16 %v467, %v466
    %v552 = vpack.c.b16 %v469, %v468
    %v553 = vpack.c.b16 %v471, %v470
    %v554 = vpack.c.b16 %v473, %v472
    %v555 = vpack.c.b16 %v475, %v474
    %v556 = vpack.c.b16 %v477, %v476
    %v557 = vpack.c.b16 %v479, %v478
    %v558 = vpack.c.b16 %v481, %v480
    %v559 = vpack.c.b16 %v483, %v482
    %v560 = vpack.c.b16 %v485, %v484
    %v561 = vpack.c.b16 %v487, %v486
    %v562 = vpack.c.b16 %v489, %v488
    %v563 = vpack.c.b16 %v491, %v490
    %v564 = vpack.c.b16 %v493, %v492
    %v565 = vpack.c.b16 %v495, %v494
    %v566 = vpack.c.b16 %v497, %v496
    %v567 = vpack.c.b16 %v499, %v498
    %v568 = vpack.c.b16 %v501, %v500
    %v569 = vpack.c.b16 %v503, %v502
    %v570 = vpack.c.b16 %v505, %v504
    %v571 = vpack.c.b16 %v507, %v506
    %636 = vmatprep.subr.bf16.mxu0 0
    %637 = vmatpush1.bf16.msra.mxu0 %v515
    %638 = vmatprep.subr.bf16.mxu0 0
    %639 = vmatpush1.bf16.msra.mxu0 %v514
    %640 = vmatprep.subr.bf16.mxu0 0
    %641 = vmatpush1.bf16.msra.mxu0 %v513
    %642 = vmatprep.subr.bf16.mxu0 0
    %643 = vmatpush1.bf16.msra.mxu0 %v512
    %644 = vmatprep.subr.bf16.mxu0 0
    %645 = vmatpush1.bf16.msra.mxu0 %v511
    %646 = vmatprep.subr.bf16.mxu0 0
    %647 = vmatpush1.bf16.msra.mxu0 %v510
    %648 = vmatprep.subr.bf16.mxu0 0
    %649 = vmatpush1.bf16.msra.mxu0 %v509
    %650 = vmatprep.subr.bf16.mxu0 0
    %651 = vmatpush1.bf16.msra.mxu0 %v508
    %652 = vmatprep.subr.bf16.mxu0 0
    %653 = vmatpush2.bf16.msra.mxu0 %v523
    %654 = vmatprep.subr.bf16.mxu0 0
    %655 = vmatpush2.bf16.msra.mxu0 %v522
    %656 = vmatprep.subr.bf16.mxu0 0
    %657 = vmatpush2.bf16.msra.mxu0 %v521
    %658 = vmatprep.subr.bf16.mxu0 0
    %659 = vmatpush2.bf16.msra.mxu0 %v520
    %660 = vmatprep.subr.bf16.mxu0 0
    %661 = vmatpush2.bf16.msra.mxu0 %v519
    %662 = vmatprep.subr.bf16.mxu0 0
    %663 = vmatpush2.bf16.msra.mxu0 %v518
    %664 = vmatprep.subr.bf16.mxu0 0
    %665 = vmatpush2.bf16.msra.mxu0 %v517
    %666 = vmatprep.subr.bf16.mxu0 0
    %667 = vmatpush2.bf16.msra.mxu0 %v516
    %668 = vmatprep.mubr.bf16.mxu0 %v116
    %669 = vmatmul.mubr.bf16.gmra.mxu0 %v115
    %v670 = vpop.f32.mrf.mxu0
    %v671 = vadd.f32 0.0, %v670
    %v672 = vpop.f32.mrf.mxu0
    %v673 = vpop.f32.mrf.mxu0
    %v674 = vpop.f32.mrf.mxu0
    %675 = vdwg.mxu0
    %676 = vmatprep.subr.bf16.mxu0 0
    %677 = vmatpush1.bf16.msra.mxu0 %v531
    %678 = vmatprep.subr.bf16.mxu0 0
    %679 = vmatpush1.bf16.msra.mxu0 %v530
    %680 = vmatprep.subr.bf16.mxu0 0
    %681 = vmatpush1.bf16.msra.mxu0 %v529
    %682 = vmatprep.subr.bf16.mxu0 0
    %683 = vmatpush1.bf16.msra.mxu0 %v528
    %684 = vmatprep.subr.bf16.mxu0 0
    %685 = vmatpush1.bf16.msra.mxu0 %v527
    %686 = vmatprep.subr.bf16.mxu0 0
    %687 = vmatpush1.bf16.msra.mxu0 %v526
    %688 = vmatprep.subr.bf16.mxu0 0
    %689 = vmatpush1.bf16.msra.mxu0 %v525
    %690 = vmatprep.subr.bf16.mxu0 0
    %691 = vmatpush1.bf16.msra.mxu0 %v524
    %692 = vmatprep.subr.bf16.mxu0 0
    %693 = vmatpush2.bf16.msra.mxu0 %v539
    %694 = vmatprep.subr.bf16.mxu0 0
    %695 = vmatpush2.bf16.msra.mxu0 %v538
    %696 = vmatprep.subr.bf16.mxu0 0
    %697 = vmatpush2.bf16.msra.mxu0 %v537
    %698 = vmatprep.subr.bf16.mxu0 0
    %699 = vmatpush2.bf16.msra.mxu0 %v536
    %700 = vmatprep.subr.bf16.mxu0 0
    %701 = vmatpush2.bf16.msra.mxu0 %v535
    %702 = vmatprep.subr.bf16.mxu0 0
    %703 = vmatpush2.bf16.msra.mxu0 %v534
    %704 = vmatprep.subr.bf16.mxu0 0
    %705 = vmatpush2.bf16.msra.mxu0 %v533
    %706 = vmatprep.subr.bf16.mxu0 0
    %707 = vmatpush2.bf16.msra.mxu0 %v532
    %708 = vmatprep.mubr.bf16.mxu0 %v118
    %709 = vmatmul.mubr.bf16.gmra.mxu0 %v117
    %v710 = vpop.f32.mrf.mxu0
    %v711 = vadd.f32 %v671, %v710
    %v712 = vpop.f32.mrf.mxu0
    %v713 = vpop.f32.mrf.mxu0
    %v714 = vpop.f32.mrf.mxu0
    %715 = vdwg.mxu0
    %716 = vmatprep.subr.bf16.mxu0 0
    %717 = vmatpush1.bf16.msra.mxu0 %v547
    %718 = vmatprep.subr.bf16.mxu0 0
    %719 = vmatpush1.bf16.msra.mxu0 %v546
    %720 = vmatprep.subr.bf16.mxu0 0
    %721 = vmatpush1.bf16.msra.mxu0 %v545
    %722 = vmatprep.subr.bf16.mxu0 0
    %723 = vmatpush1.bf16.msra.mxu0 %v544
    %724 = vmatprep.subr.bf16.mxu0 0
    %725 = vmatpush1.bf16.msra.mxu0 %v543
    %726 = vmatprep.subr.bf16.mxu0 0
    %727 = vmatpush1.bf16.msra.mxu0 %v542
    %728 = vmatprep.subr.bf16.mxu0 0
    %729 = vmatpush1.bf16.msra.mxu0 %v541
    %730 = vmatprep.subr.bf16.mxu0 0
    %731 = vmatpush1.bf16.msra.mxu0 %v540
    %732 = vmatprep.subr.bf16.mxu0 0
    %733 = vmatpush2.bf16.msra.mxu0 %v555
    %734 = vmatprep.subr.bf16.mxu0 0
    %735 = vmatpush2.bf16.msra.mxu0 %v554
    %736 = vmatprep.subr.bf16.mxu0 0
    %737 = vmatpush2.bf16.msra.mxu0 %v553
    %738 = vmatprep.subr.bf16.mxu0 0
    %739 = vmatpush2.bf16.msra.mxu0 %v552
    %740 = vmatprep.subr.bf16.mxu0 0
    %741 = vmatpush2.bf16.msra.mxu0 %v551
    %742 = vmatprep.subr.bf16.mxu0 0
    %743 = vmatpush2.bf16.msra.mxu0 %v550
    %744 = vmatprep.subr.bf16.mxu0 0
    %745 = vmatpush2.bf16.msra.mxu0 %v549
    %746 = vmatprep.subr.bf16.mxu0 0
    %747 = vmatpush2.bf16.msra.mxu0 %v548
    %748 = vmatprep.mubr.bf16.mxu0 %v120
    %749 = vmatmul.mubr.bf16.gmra.mxu0 %v119
    %v750 = vpop.f32.mrf.mxu0
    %v751 = vadd.f32 %v711, %v750
    %v752 = vpop.f32.mrf.mxu0
    %v753 = vpop.f32.mrf.mxu0
    %v754 = vpop.f32.mrf.mxu0
    %755 = vdwg.mxu0
    %756 = vmatprep.subr.bf16.mxu0 0
    %757 = vmatpush1.bf16.msra.mxu0 %v563
    %758 = vmatprep.subr.bf16.mxu0 0
    %759 = vmatpush1.bf16.msra.mxu0 %v562
    %760 = vmatprep.subr.bf16.mxu0 0
    %761 = vmatpush1.bf16.msra.mxu0 %v561
    %762 = vmatprep.subr.bf16.mxu0 0
    %763 = vmatpush1.bf16.msra.mxu0 %v560
    %764 = vmatprep.subr.bf16.mxu0 0
    %765 = vmatpush1.bf16.msra.mxu0 %v559
    %766 = vmatprep.subr.bf16.mxu0 0
    %767 = vmatpush1.bf16.msra.mxu0 %v558
    %768 = vmatprep.subr.bf16.mxu0 0
    %769 = vmatpush1.bf16.msra.mxu0 %v557
    %770 = vmatprep.subr.bf16.mxu0 0
    %771 = vmatpush1.bf16.msra.mxu0 %v556
    %772 = vmatprep.subr.bf16.mxu0 0
    %773 = vmatpush2.bf16.msra.mxu0 %v571
    %774 = vmatprep.subr.bf16.mxu0 0
    %775 = vmatpush2.bf16.msra.mxu0 %v570
    %776 = vmatprep.subr.bf16.mxu0 0
    %777 = vmatpush2.bf16.msra.mxu0 %v569
    %778 = vmatprep.subr.bf16.mxu0 0
    %779 = vmatpush2.bf16.msra.mxu0 %v568
    %780 = vmatprep.subr.bf16.mxu0 0
    %781 = vmatpush2.bf16.msra.mxu0 %v567
    %782 = vmatprep.subr.bf16.mxu0 0
    %783 = vmatpush2.bf16.msra.mxu0 %v566
    %784 = vmatprep.subr.bf16.mxu0 0
    %785 = vmatpush2.bf16.msra.mxu0 %v565
    %786 = vmatprep.subr.bf16.mxu0 0
    %787 = vmatpush2.bf16.msra.mxu0 %v564
    %788 = vmatprep.mubr.bf16.mxu0 %v122
    %789 = vmatmul.mubr.bf16.gmra.mxu0 %v121
    %v790 = vpop.f32.mrf.mxu0
    %v791 = vadd.f32 %v751, %v790
    %v792 = vpop.f32.mrf.mxu0
    %v793 = vpop.f32.mrf.mxu0
    %v794 = vpop.f32.mrf.mxu0
    %795 = vdwg.mxu0
    %v796 = vadd.f32 %v123, %v791
    %797 = vst [vmem:[#allocation2] sm:$0x3] %v796
    %v798 = vrot.slane %v69, 4
    %v800 = vrot.slane %v70, 4
    %v802 = vcombine.low %v69, %v798
    %v804 = vunpack.c.l.s4 1934713408
    %v805 = vunpack.c.0.s8 %v804
    %v806 = vlaneseq
    %v807 = vshrl.u32 %v806, 7
    %v808 = vsub.s32 %v805, %v807
    %v809 = vrot.slane %v802, %v808
    %v810 = vcombine.high %v809, 0.0
    %v811 = vcombine.low %v70, %v800
    %v813 = vunpack.c.l.s4 1934713408
    %v814 = vunpack.c.0.s8 %v813
    %v815 = vlaneseq
    %v816 = vshrl.u32 %v815, 7
    %v817 = vsub.s32 %v814, %v816
    %v818 = vrot.slane %v811, %v817
    %v819 = vcombine.high %v818, 0.0
    %v824 = vcombine.low %v809, %v818
    %v826 = vunpack.c.l.s4 1983009808
    %v827 = vunpack.c.0.s8 %v826
    %v828 = vlaneseq
    %v829 = vshrl.u32 %v828, 7
    %v830 = vsub.s32 %v827, %v829
    %v831 = vrot.slane %v824, %v830
    %v832 = vcombine.high %v831, %v831
    %v833 = vcombine.low %v810, %v819
    %v835 = vunpack.c.l.s4 1983009808
    %v836 = vunpack.c.0.s8 %v835
    %v837 = vlaneseq
    %v838 = vshrl.u32 %v837, 7
    %v839 = vsub.s32 %v836, %v838
    %v840 = vrot.slane %v833, %v839
    %v841 = vcombine.high %v840, %v840
    %vm846 = vcmask 1043456
    %v847 = vsel %vm846, %v831, -inf
    %v848 = vsel %vm846, %v832, -inf
    %v849 = vmax.f32 %v847, %v848
    %850 = vmax.xlane.f32.xlu0 %v849
    %v851 = vpop.xlane.xlu0 %850
    %v852 = vsel %vm846, %v840, -inf
    %v853 = vsel %vm846, %v841, -inf
    %v854 = vmax.f32 %v852, %v853
    %855 = vmax.xlane.f32.xlu0 %v854
    %v856 = vpop.xlane.xlu0 %855
    %v859 = vlaneseq
    %v860 = vand.u32 %v859, 127
    %v861 = vlaneseq
    %v862 = vshrl.u32 %v861, 7
    %v863 = vsub.s32 %v860, %v862
    %v864 = vrot.slane %v851, %v863
    %v865 = vlaneseq
    %v866 = vshrl.u32 %v865, 7
    %v867 = vsub.s32 %v860, %v866
    %v868 = vrot.slane %v856, %v867
    %vm869 = vcmask 1041409
    %v870 = vsel %vm869, %v868, %v864
    %s872 = smul.u32 0, 2
    %s873 = scalar_lea.vmem [#allocation3], %s872
    %vm874 = vcmask 25600
    %875 = vst.msk [vmem:[%s873] sm:$0x3] %vm874, %v870
    // Predicated region
    $region38: #{tpu_custom_call.1} parent=1 // pred_check
      %p876 = pneg %p64
    $region39: #{tpu_custom_call.1} parent=1 // pred_check_branch
      %878 = sbr.rel (%p876) target = $region41
    $region40: #{tpu_custom_call.1} parent=1 // pred_region
      %v879 = vld [vmem:[#allocation2] sm:$0x3]
      %v880 = vld [vmem:[%s2] sm:$0x1]
      %v882 = vlaneseq
      %v883 = vshrl.u32 %v882, 7
      %v884 = vsub.s32 0, %v883
      %v885 = vrot.slane %v880, %v884
      %v887 = vadd.f32 %v879, %v885
      %v888 = vmax.f32 %v887, 0.0
      %v889 = vpack.c.bf16 %v888, %v888
      %v890 = vld [vmem:[#allocation9] sm:$0xf]
      %v891 = vld [vmem:[#allocation9 + $0x4] sm:$0xf]
      %v892 = vld [vmem:[#allocation9 + $0x8] sm:$0xf]
      %v893 = vld [vmem:[#allocation9 + $0xc] sm:$0xf]
      %v894 = vld [vmem:[#allocation9 + $0x10] sm:$0xf]
      %v895 = vld [vmem:[#allocation9 + $0x14] sm:$0xf]
      %v896 = vld [vmem:[#allocation9 + $0x18] sm:$0xf]
      %v897 = vld [vmem:[#allocation9 + $0x1c] sm:$0xf]
      %v898 = vld [vmem:[#allocation9 + $0x20] sm:$0xf]
      %v899 = vld [vmem:[#allocation9 + $0x24] sm:$0xf]
      %v900 = vld [vmem:[#allocation9 + $0x28] sm:$0xf]
      %v901 = vld [vmem:[#allocation9 + $0x2c] sm:$0xf]
      %v902 = vld [vmem:[#allocation9 + $0x30] sm:$0xf]
      %v903 = vld [vmem:[#allocation9 + $0x34] sm:$0xf]
      %v904 = vld [vmem:[#allocation9 + $0x38] sm:$0xf]
      %v905 = vld [vmem:[#allocation9 + $0x3c] sm:$0xf]
      %v906 = vld [vmem:[%s4] sm:$0x1]
      %v908 = vlaneseq
      %v909 = vshrl.u32 %v908, 7
      %v910 = vsub.s32 0, %v909
      %v911 = vrot.slane %v906, %v910
      %v929 = vunpack.c.l.b16 %v890
      %v930 = vunpack.c.l.b16 %v891
      %v931 = vunpack.c.l.b16 %v892
      %v932 = vunpack.c.l.b16 %v893
      %v933 = vunpack.c.l.b16 %v894
      %v934 = vunpack.c.l.b16 %v895
      %v935 = vunpack.c.l.b16 %v896
      %v936 = vunpack.c.l.b16 %v897
      %v937 = vunpack.c.l.b16 %v898
      %v938 = vunpack.c.l.b16 %v899
      %v939 = vunpack.c.l.b16 %v900
      %v940 = vunpack.c.l.b16 %v901
      %v941 = vunpack.c.l.b16 %v902
      %v942 = vunpack.c.l.b16 %v903
      %v943 = vunpack.c.l.b16 %v904
      %v944 = vunpack.c.l.b16 %v905
      %v945 = vpack.c.b16 %v930, %v929
      %v946 = vpack.c.b16 %v932, %v931
      %v947 = vpack.c.b16 %v934, %v933
      %v948 = vpack.c.b16 %v936, %v935
      %v949 = vpack.c.b16 %v938, %v937
      %v950 = vpack.c.b16 %v940, %v939
      %v951 = vpack.c.b16 %v942, %v941
      %v952 = vpack.c.b16 %v944, %v943
      %961 = vmatprep.subr.bf16.mxu0 0
      %962 = vmatpush1.bf16.msra.mxu0 %v952
      %963 = vmatprep.subr.bf16.mxu0 0
      %964 = vmatpush1.bf16.msra.mxu0 %v951
      %965 = vmatprep.subr.bf16.mxu0 0
      %966 = vmatpush1.bf16.msra.mxu0 %v950
      %967 = vmatprep.subr.bf16.mxu0 0
      %968 = vmatpush1.bf16.msra.mxu0 %v949
      %969 = vmatprep.subr.bf16.mxu0 0
      %970 = vmatpush1.bf16.msra.mxu0 %v948
      %971 = vmatprep.subr.bf16.mxu0 0
      %972 = vmatpush1.bf16.msra.mxu0 %v947
      %973 = vmatprep.subr.bf16.mxu0 0
      %974 = vmatpush1.bf16.msra.mxu0 %v946
      %975 = vmatprep.subr.bf16.mxu0 0
      %976 = vmatpush1.bf16.msra.mxu0 %v945
      %977 = vmatprep.subr.bf16.mxu0 0
      %978 = vmatpush2.bf16.msra.mxu0 0
      %979 = vmatprep.subr.bf16.mxu0 0
      %980 = vmatpush2.bf16.msra.mxu0 0
      %981 = vmatprep.subr.bf16.mxu0 0
      %982 = vmatpush2.bf16.msra.mxu0 0
      %983 = vmatprep.subr.bf16.mxu0 0
      %984 = vmatpush2.bf16.msra.mxu0 0
      %985 = vmatprep.subr.bf16.mxu0 0
      %986 = vmatpush2.bf16.msra.mxu0 0
      %987 = vmatprep.subr.bf16.mxu0 0
      %988 = vmatpush2.bf16.msra.mxu0 0
      %989 = vmatprep.subr.bf16.mxu0 0
      %990 = vmatpush2.bf16.msra.mxu0 0
      %991 = vmatprep.subr.bf16.mxu0 0
      %992 = vmatpush2.bf16.msra.mxu0 0
      %993 = vmatprep.mubr.bf16.mxu0 0
      %994 = vmatmul.mubr.bf16.gmra.mxu0 %v889
      %v995 = vpop.f32.mrf.mxu0
      %v996 = vadd.f32 %v911, %v995
      %v997 = vpop.f32.mrf.mxu0
      %v998 = vpop.f32.mrf.mxu0
      %v999 = vpop.f32.mrf.mxu0
      %1000 = vdwg.mxu0
      %v1001 = vmax.f32 %v996, 0.0
      %1002 = vst [vmem:[#allocation11] sm:$0x3] %v1001
      %v1003 = vld [vmem:[#allocation3] sm:$0x3]
      %vm1004 = vcmask 31744
      %v1005 = vsel %vm1004, %v1003, 0.0
      %1006 = vst [vmem:[#allocation10] sm:$0x3] %v1005
    $region41: #{tpu_custom_call.1} parent=1 // pred_fallthru
      _
    // Predicated region
    $region42: #{tpu_custom_call.1} parent=1 // pred_check
      _
    $region43: #{tpu_custom_call.1} parent=1 // pred_check_branch
      %1008 = sbr.rel (0) target = $region45
    $region44: #{tpu_custom_call.1} parent=1 // pred_region
      %s1010 = ssub.s32 32, 32
      %1011 = vsyncadd [#allocation6], %s1010
      %s1013 = sshll.u32 [#allocation10], 4
      %s1014 = int_to_ptr.vmem [resolvable:$true] %s1013
      %1016 = dma.vmem_to_hbm [thread:$0]  %s1014, 32, %s5, [#allocation6]
    $region45: #{tpu_custom_call.1} parent=1 // pred_fallthru
      _
    // Predicated region
    $region46: #{tpu_custom_call.1} parent=1 // pred_check
      _
    $region47: #{tpu_custom_call.1} parent=1 // pred_check_branch
      %1018 = sbr.rel (0) target = $region49
    $region48: #{tpu_custom_call.1} parent=1 // pred_region
      %s1020 = ssub.s32 32, 32
      %1021 = vsyncadd [#allocation12], %s1020
      %s1023 = sshll.u32 [#allocation11], 4
      %s1024 = int_to_ptr.vmem [resolvable:$true] %s1023
      %1026 = dma.vmem_to_hbm [thread:$0]  %s1024, 32, %s6, [#allocation12]
    $region49: #{tpu_custom_call.1} parent=1 // pred_fallthru
      _
    // Predicated region
    $region50: #{tpu_custom_call.1} parent=1 // pred_check
      _
    $region51: #{tpu_custom_call.1} parent=1 // pred_check_branch
      %1028 = sbr.rel (0) target = $region53
    $region52: #{tpu_custom_call.1} parent=1 // pred_region
      %1029 = dma.done [#allocation6], 32
    $region53: #{tpu_custom_call.1} parent=1 // pred_fallthru
      _
    // Predicated region
    $region54: #{tpu_custom_call.1} parent=1 // pred_check
      _
    $region55: #{tpu_custom_call.1} parent=1 // pred_check_branch
      %1031 = sbr.rel (0) target = $region57
    $region56: #{tpu_custom_call.1} parent=1 // pred_region
      %1032 = dma.done [#allocation12], 32
    $region57: #{tpu_custom_call.1} parent=1 // pred_fallthru
      _
    %1033 = vsyncpa [#allocation5], 1
    %1034 = vsyncpa [#allocation8], 1
    %1035 = vsyncpa [#allocation6], 1
    %1036 = vsyncpa [#allocation12], 1

// kernel: tpu_custom_call.1
$region0: #{tpu_custom_call.1}
  #allocation0 [shape = 'u32[]', space=smem, size = 0x4, offset = 0x4, fixed_abs, tag = 'smem constant byte address 0x4 - core index']
  #allocation1 [shape = 'u32[144,128]{1,0:T(1,128)}', space=vmem, size = 0x12000, scoped, tag = 'internal scratch']
  #allocation2 [shape = 'f32[2,128]{1,0:T(2,128)}', space=vmem, size = 0x400, scoped, tag = 'scratch operand']
  #allocation3 [shape = 'f32[1,2,4]{2,1,0:T(2,128)}', space=vmem, size = 0x400, scoped, tag = 'scratch operand']
  %s0 = inlined_call_operand.hbm [shape: f32[2,1024], index: 0, kind: input, shape index: {}]
  %s1 = inlined_call_operand.hbm [shape: bf16[1024,128], index: 1, kind: input, shape index: {}]
  %s2 = inlined_call_operand.vmem [shape: f32[1,128], index: 2, kind: input, shape index: {}]
  %s3 = inlined_call_operand.hbm [shape: bf16[128,128], index: 3, kind: input, shape index: {}]
  %s4 = inlined_call_operand.vmem [shape: f32[1,128], index: 4, kind: input, shape index: {}]
  %s5 = inlined_call_operand.hbm [shape: f32[2,128], index: 5, kind: output, shape index: {0}]
  %s6 = inlined_call_operand.hbm [shape: f32[2,128], index: 6, kind: output, shape index: {1}]
  %7 = xla_tuple %s5, %s6
  %s8 = sld [smem:[#allocation0]]
  $region58: #{tpu_custom_call.1} parent=0
    _
  %s10 = ssub.s32 1, %s8
  %s11 = scalar_select 0, %s10, %s8
  $region1: #{tpu_custom_call.1} parent=0
    #allocation4 [shape = 'u8[8192]{0}', space=vmem, size = 0x2000, scoped, tag = 'input window, operand 0, single buffered']
    #allocation5 [shape = 's32[1]{0}', space=sflag, size = 0x4, scoped, tag = 'scoped memory for tpu_custom_call.1']
    #allocation6 [shape = 's32[1]{0}', space=sflag, size = 0x4, scoped, tag = 'scoped memory for tpu_custom_call.1']
    #allocation7 [shape = 'u8[262144]{0}', space=vmem, size = 0x40000, scoped, tag = 'input window, operand 1, single buffered']
    #allocation8 [shape = 's32[1]{0}', space=sflag, size = 0x4, scoped, tag = 'scoped memory for tpu_custom_call.1']
    #allocation9 [shape = 'u8[32768]{0}', space=vmem, size = 0x8000, scoped, tag = 'input window, operand 3, single buffered']
    #allocation10 [shape = 'u8[1024]{0}', space=vmem, size = 0x400, scoped, tag = 'output window, operand 0, single buffered']
    #allocation11 [shape = 'u8[1024]{0}', space=vmem, size = 0x400, scoped, tag = 'output window, operand 1, single buffered']
    #allocation12 [shape = 's32[1]{0}', space=sflag, size = 0x4, scoped, tag = 'scoped memory for tpu_custom_call.1']
    %12 = vsyncpa [#allocation5], 0
    %13 = vsyncpa [#allocation8], 0
    %14 = vsyncpa [#allocation6], 0
    %15 = vsyncpa [#allocation12], 0
    // Predicated region
    $region2: #{tpu_custom_call.1} parent=1 // pred_check
      _
    $region3: #{tpu_custom_call.1} parent=1 // pred_check_branch
      %17 = sbr.rel (0) target = $region5
    $region4: #{tpu_custom_call.1} parent=1 // pred_region
      %s19 = ssub.s32 256, 256
      %20 = vsyncadd [#allocation5], %s19
      %s22 = sshll.u32 [#allocation4], 4
      %s23 = int_to_ptr.vmem [resolvable:$true] %s22
      %25 = dma.hbm_to_vmem [thread:$0]  %s0, 256, %s23, [#allocation5]
    $region5: #{tpu_custom_call.1} parent=1 // pred_fallthru
      _
    // Predicated region
    $region6: #{tpu_custom_call.1} parent=1 // pred_check
      _
    $region7: #{tpu_custom_call.1} parent=1 // pred_check_branch
      %27 = sbr.rel (0) target = $region9
    $region8: #{tpu_custom_call.1} parent=1 // pred_region
      %s29 = ssub.s32 8192, 8192
      %30 = vsyncadd [#allocation8], %s29
      %s31 = sshll.u32 [#allocation7], 4
      %s32 = int_to_ptr.vmem [resolvable:$true] %s31
      %37 = dma.hbm_to_vmem [thread:$0]  %s1, 8192, %s32, [#allocation8], 64, 64, 4
    $region9: #{tpu_custom_call.1} parent=1 // pred_fallthru
      _
    // Predicated region
    $region10: #{tpu_custom_call.1} parent=1 // pred_check
      _
    $region11: #{tpu_custom_call.1} parent=1 // pred_check_branch
      %39 = sbr.rel (0) target = $region13
    $region12: #{tpu_custom_call.1} parent=1 // pred_region
      _
    $region13: #{tpu_custom_call.1} parent=1 // pred_fallthru
      _
    // Predicated region
    $region14: #{tpu_custom_call.1} parent=1 // pred_check
      _
    $region15: #{tpu_custom_call.1} parent=1 // pred_check_branch
      %41 = sbr.rel (0) target = $region17
    $region16: #{tpu_custom_call.1} parent=1 // pred_region
      %s43 = ssub.s32 1024, 1024
      %44 = vsyncadd [#allocation8], %s43
      %s45 = sshll.u32 [#allocation9], 4
      %s46 = int_to_ptr.vmem [resolvable:$true] %s45
      %51 = dma.hbm_to_vmem [thread:$0]  %s3, 1024, %s46, [#allocation8], 64, 64, 4
    $region17: #{tpu_custom_call.1} parent=1 // pred_fallthru
      _
    // Predicated region
    $region18: #{tpu_custom_call.1} parent=1 // pred_check
      _
    $region19: #{tpu_custom_call.1} parent=1 // pred_check_branch
      %53 = sbr.rel (0) target = $region21
    $region20: #{tpu_custom_call.1} parent=1 // pred_region
      _
    $region21: #{tpu_custom_call.1} parent=1 // pred_fallthru
      _
    // Predicated region
    $region22: #{tpu_custom_call.1} parent=1 // pred_check
      _
    $region23: #{tpu_custom_call.1} parent=1 // pred_check_branch
      %55 = sbr.rel (0) target = $region25
    $region24: #{tpu_custom_call.1} parent=1 // pred_region
      %56 = dma.done [#allocation5], 256
    $region25: #{tpu_custom_call.1} parent=1 // pred_fallthru
      _
    // Predicated region
    $region26: #{tpu_custom_call.1} parent=1 // pred_check
      _
    $region27: #{tpu_custom_call.1} parent=1 // pred_check_branch
      %58 = sbr.rel (0) target = $region29
    $region28: #{tpu_custom_call.1} parent=1 // pred_region
      %59 = dma.done [#allocation8], 8192
    $region29: #{tpu_custom_call.1} parent=1 // pred_fallthru
      _
    // Predicated region
    $region30: #{tpu_custom_call.1} parent=1 // pred_check
      _
    $region31: #{tpu_custom_call.1} parent=1 // pred_check_branch
      %61 = sbr.rel (0) target = $region33
    $region32: #{tpu_custom_call.1} parent=1 // pred_region
      %62 = dma.done [#allocation8], 1024
    $region33: #{tpu_custom_call.1} parent=1 // pred_fallthru
      _
    %p64 = scmp.eq.s32.totalorder 0, 0
    // Predicated region
    $region34: #{tpu_custom_call.1} parent=1 // pred_check
      %p65 = pneg %p64
    $region35: #{tpu_custom_call.1} parent=1 // pred_check_branch
      %67 = sbr.rel (%p65) target = $region37
    $region36: #{tpu_custom_call.1} parent=1 // pred_region
      %68 = vst [vmem:[#allocation2] sm:$0x3] 0.0
    $region37: #{tpu_custom_call.1} parent=1 // pred_fallthru
      _
    %v69 = vld [vmem:[#allocation4] sm:$0xff]
    %v70 = vld [vmem:[#allocation4 + $0x8] sm:$0xff]
    %v73 = vcombine.high %v69, %v69
    %v75 = vunpack.c.l.s4 1983009808
    %v76 = vunpack.c.0.s8 %v75
    %v77 = vlaneseq
    %v78 = vshrl.u32 %v77, 7
    %v79 = vsub.s32 %v76, %v78
    %v80 = vrot.slane %v69, %v79
    %v82 = vunpack.c.l.s4 1983009808
    %v83 = vunpack.c.0.s8 %v82
    %v84 = vlaneseq
    %v85 = vshrl.u32 %v84, 7
    %v86 = vsub.s32 %v83, %v85
    %v87 = vrot.slane %v73, %v86
    %v88 = vcombine.high %v80, %v80
    %v89 = vcombine.high %v87, %v87
    %v90 = vcombine.high %v70, %v70
    %v92 = vunpack.c.l.s4 1983009808
    %v93 = vunpack.c.0.s8 %v92
    %v94 = vlaneseq
    %v95 = vshrl.u32 %v94, 7
    %v96 = vsub.s32 %v93, %v95
    %v97 = vrot.slane %v70, %v96
    %v99 = vunpack.c.l.s4 1983009808
    %v100 = vunpack.c.0.s8 %v99
    %v101 = vlaneseq
    %v102 = vshrl.u32 %v101, 7
    %v103 = vsub.s32 %v100, %v102
    %v104 = vrot.slane %v90, %v103
    %v105 = vcombine.high %v97, %v97
    %v106 = vcombine.high %v104, %v104
    %v115 = vpack.c.bf16 %v80, %v80
    %v116 = vpack.c.bf16 %v88, %v88
    %v117 = vpack.c.bf16 %v87, %v87
    %v118 = vpack.c.bf16 %v89, %v89
    %v119 = vpack.c.bf16 %v97, %v97
    %v120 = vpack.c.bf16 %v105, %v105
    %v121 = vpack.c.bf16 %v104, %v104
    %v122 = vpack.c.bf16 %v106, %v106
    %v123 = vld [vmem:[#allocation2] sm:$0x3]
    %v124 = vld [vmem:[#allocation7] sm:$0xf]
    %v125 = vld [vmem:[#allocation7 + $0x4] sm:$0xf]
    %v126 = vld [vmem:[#allocation7 + $0x8] sm:$0xf]
    %v127 = vld [vmem:[#allocation7 + $0xc] sm:$0xf]
    %v128 = vld [vmem:[#allocation7 + $0x10] sm:$0xf]
    %v129 = vld [vmem:[#allocation7 + $0x14] sm:$0xf]
    %v130 = vld [vmem:[#allocation7 + $0x18] sm:$0xf]
    %v131 = vld [vmem:[#allocation7 + $0x1c] sm:$0xf]
    %v132 = vld [vmem:[#allocation7 + $0x20] sm:$0xf]
    %v133 = vld [vmem:[#allocation7 + $0x24] sm:$0xf]
    %v134 = vld [vmem:[#allocation7 + $0x28] sm:$0xf]
    %v135 = vld [vmem:[#allocation7 + $0x2c] sm:$0xf]
    %v136 = vld [vmem:[#allocation7 + $0x30] sm:$0xf]
    %v137 = vld [vmem:[#allocation7 + $0x34] sm:$0xf]
    %v138 = vld [vmem:[#allocation7 + $0x38] sm:$0xf]
    %v139 = vld [vmem:[#allocation7 + $0x3c] sm:$0xf]
    %v140 = vld [vmem:[#allocation7 + $0x40] sm:$0xf]
    %v141 = vld [vmem:[#allocation7 + $0x44] sm:$0xf]
    %v142 = vld [vmem:[#allocation7 + $0x48] sm:$0xf]
    %v143 = vld [vmem:[#allocation7 + $0x4c] sm:$0xf]
    %v144 = vld [vmem:[#allocation7 + $0x50] sm:$0xf]
    %v145 = vld [vmem:[#allocation7 + $0x54] sm:$0xf]
    %v146 = vld [vmem:[#allocation7 + $0x58] sm:$0xf]
    %v147 = vld [vmem:[#allocation7 + $0x5c] sm:$0xf]
    %v148 = vld [vmem:[#allocation7 + $0x60] sm:$0xf]
    %v149 = vld [vmem:[#allocation7 + $0x64] sm:$0xf]
    %v150 = vld [vmem:[#allocation7 + $0x68] sm:$0xf]
    %v151 = vld [vmem:[#allocation7 + $0x6c] sm:$0xf]
    %v152 = vld [vmem:[#allocation7 + $0x70] sm:$0xf]
    %v153 = vld [vmem:[#allocation7 + $0x74] sm:$0xf]
    %v154 = vld [vmem:[#allocation7 + $0x78] sm:$0xf]
    %v155 = vld [vmem:[#allocation7 + $0x7c] sm:$0xf]
    %v156 = vld [vmem:[#allocation7 + $0x80] sm:$0xf]
    %v157 = vld [vmem:[#allocation7 + $0x84] sm:$0xf]
    %v158 = vld [vmem:[#allocation7 + $0x88] sm:$0xf]
    %v159 = vld [vmem:[#allocation7 + $0x8c] sm:$0xf]
    %v160 = vld [vmem:[#allocation7 + $0x90] sm:$0xf]
    %v161 = vld [vmem:[#allocation7 + $0x94] sm:$0xf]
    %v162 = vld [vmem:[#allocation7 + $0x98] sm:$0xf]
    %v163 = vld [vmem:[#allocation7 + $0x9c] sm:$0xf]
    %v164 = vld [vmem:[#allocation7 + $0xa0] sm:$0xf]
    %v165 = vld [vmem:[#allocation7 + $0xa4] sm:$0xf]
    %v166 = vld [vmem:[#allocation7 + $0xa8] sm:$0xf]
    %v167 = vld [vmem:[#allocation7 + $0xac] sm:$0xf]
    %v168 = vld [vmem:[#allocation7 + $0xb0] sm:$0xf]
    %v169 = vld [vmem:[#allocation7 + $0xb4] sm:$0xf]
    %v170 = vld [vmem:[#allocation7 + $0xb8] sm:$0xf]
    %v171 = vld [vmem:[#allocation7 + $0xbc] sm:$0xf]
    %v172 = vld [vmem:[#allocation7 + $0xc0] sm:$0xf]
    %v173 = vld [vmem:[#allocation7 + $0xc4] sm:$0xf]
    %v174 = vld [vmem:[#allocation7 + $0xc8] sm:$0xf]
    %v175 = vld [vmem:[#allocation7 + $0xcc] sm:$0xf]
    %v176 = vld [vmem:[#allocation7 + $0xd0] sm:$0xf]
    %v177 = vld [vmem:[#allocation7 + $0xd4] sm:$0xf]
    %v178 = vld [vmem:[#allocation7 + $0xd8] sm:$0xf]
    %v179 = vld [vmem:[#allocation7 + $0xdc] sm:$0xf]
    %v180 = vld [vmem:[#allocation7 + $0xe0] sm:$0xf]
    %v181 = vld [vmem:[#allocation7 + $0xe4] sm:$0xf]
    %v182 = vld [vmem:[#allocation7 + $0xe8] sm:$0xf]
    %v183 = vld [vmem:[#allocation7 + $0xec] sm:$0xf]
    %v184 = vld [vmem:[#allocation7 + $0xf0] sm:$0xf]
    %v185 = vld [vmem:[#allocation7 + $0xf4] sm:$0xf]
    %v186 = vld [vmem:[#allocation7 + $0xf8] sm:$0xf]
    %v187 = vld [vmem:[#allocation7 + $0xfc] sm:$0xf]
    %v188 = vld [vmem:[#allocation7 + $0x100] sm:$0xf]
    %v189 = vld [vmem:[#allocation7 + $0x104] sm:$0xf]
    %v190 = vld [vmem:[#allocation7 + $0x108] sm:$0xf]
    %v191 = vld [vmem:[#allocation7 + $0x10c] sm:$0xf]
    %v192 = vld [vmem:[#allocation7 + $0x110] sm:$0xf]
    %v193 = vld [vmem:[#allocation7 + $0x114] sm:$0xf]
    %v194 = vld [vmem:[#allocation7 + $0x118] sm:$0xf]
    %v195 = vld [vmem:[#allocation7 + $0x11c] sm:$0xf]
    %v196 = vld [vmem:[#allocation7 + $0x120] sm:$0xf]
    %v197 = vld [vmem:[#allocation7 + $0x124] sm:$0xf]
    %v198 = vld [vmem:[#allocation7 + $0x128] sm:$0xf]
    %v199 = vld [vmem:[#allocation7 + $0x12c] sm:$0xf]
    %v200 = vld [vmem:[#allocation7 + $0x130] sm:$0xf]
    %v201 = vld [vmem:[#allocation7 + $0x134] sm:$0xf]
    %v202 = vld [vmem:[#allocation7 + $0x138] sm:$0xf]
    %v203 = vld [vmem:[#allocation7 + $0x13c] sm:$0xf]
    %v204 = vld [vmem:[#allocation7 + $0x140] sm:$0xf]
    %v205 = vld [vmem:[#allocation7 + $0x144] sm:$0xf]
    %v206 = vld [vmem:[#allocation7 + $0x148] sm:$0xf]
    %v207 = vld [vmem:[#allocation7 + $0x14c] sm:$0xf]
    %v208 = vld [vmem:[#allocation7 + $0x150] sm:$0xf]
    %v209 = vld [vmem:[#allocation7 + $0x154] sm:$0xf]
    %v210 = vld [vmem:[#allocation7 + $0x158] sm:$0xf]
    %v211 = vld [vmem:[#allocation7 + $0x15c] sm:$0xf]
    %v212 = vld [vmem:[#allocation7 + $0x160] sm:$0xf]
    %v213 = vld [vmem:[#allocation7 + $0x164] sm:$0xf]
    %v214 = vld [vmem:[#allocation7 + $0x168] sm:$0xf]
    %v215 = vld [vmem:[#allocation7 + $0x16c] sm:$0xf]
    %v216 = vld [vmem:[#allocation7 + $0x170] sm:$0xf]
    %v217 = vld [vmem:[#allocation7 + $0x174] sm:$0xf]
    %v218 = vld [vmem:[#allocation7 + $0x178] sm:$0xf]
    %v219 = vld [vmem:[#allocation7 + $0x17c] sm:$0xf]
    %v220 = vld [vmem:[#allocation7 + $0x180] sm:$0xf]
    %v221 = vld [vmem:[#allocation7 + $0x184] sm:$0xf]
    %v222 = vld [vmem:[#allocation7 + $0x188] sm:$0xf]
    %v223 = vld [vmem:[#allocation7 + $0x18c] sm:$0xf]
    %v224 = vld [vmem:[#allocation7 + $0x190] sm:$0xf]
    %v225 = vld [vmem:[#allocation7 + $0x194] sm:$0xf]
    %v226 = vld [vmem:[#allocation7 + $0x198] sm:$0xf]
    %v227 = vld [vmem:[#allocation7 + $0x19c] sm:$0xf]
    %v228 = vld [vmem:[#allocation7 + $0x1a0] sm:$0xf]
    %v229 = vld [vmem:[#allocation7 + $0x1a4] sm:$0xf]
    %v230 = vld [vmem:[#allocation7 + $0x1a8] sm:$0xf]
    %v231 = vld [vmem:[#allocation7 + $0x1ac] sm:$0xf]
    %v232 = vld [vmem:[#allocation7 + $0x1b0] sm:$0xf]
    %v233 = vld [vmem:[#allocation7 + $0x1b4] sm:$0xf]
    %v234 = vld [vmem:[#allocation7 + $0x1b8] sm:$0xf]
    %v235 = vld [vmem:[#allocation7 + $0x1bc] sm:$0xf]
    %v236 = vld [vmem:[#allocation7 + $0x1c0] sm:$0xf]
    %v237 = vld [vmem:[#allocation7 + $0x1c4] sm:$0xf]
    %v238 = vld [vmem:[#allocation7 + $0x1c8] sm:$0xf]
    %v239 = vld [vmem:[#allocation7 + $0x1cc] sm:$0xf]
    %v240 = vld [vmem:[#allocation7 + $0x1d0] sm:$0xf]
    %v241 = vld [vmem:[#allocation7 + $0x1d4] sm:$0xf]
    %v242 = vld [vmem:[#allocation7 + $0x1d8] sm:$0xf]
    %v243 = vld [vmem:[#allocation7 + $0x1dc] sm:$0xf]
    %v244 = vld [vmem:[#allocation7 + $0x1e0] sm:$0xf]
    %v245 = vld [vmem:[#allocation7 + $0x1e4] sm:$0xf]
    %v246 = vld [vmem:[#allocation7 + $0x1e8] sm:$0xf]
    %v247 = vld [vmem:[#allocation7 + $0x1ec] sm:$0xf]
    %v248 = vld [vmem:[#allocation7 + $0x1f0] sm:$0xf]
    %v249 = vld [vmem:[#allocation7 + $0x1f4] sm:$0xf]
    %v250 = vld [vmem:[#allocation7 + $0x1f8] sm:$0xf]
    %v251 = vld [vmem:[#allocation7 + $0x1fc] sm:$0xf]
    %v380 = vunpack.c.l.b16 %v124
    %v381 = vunpack.c.l.b16 %v125
    %v382 = vunpack.c.l.b16 %v126
    %v383 = vunpack.c.l.b16 %v127
    %v384 = vunpack.c.l.b16 %v128
    %v385 = vunpack.c.l.b16 %v129
    %v386 = vunpack.c.l.b16 %v130
    %v387 = vunpack.c.l.b16 %v131
    %v388 = vunpack.c.l.b16 %v132
    %v389 = vunpack.c.l.b16 %v133
    %v390 = vunpack.c.l.b16 %v134
    %v391 = vunpack.c.l.b16 %v135
    %v392 = vunpack.c.l.b16 %v136
    %v393 = vunpack.c.l.b16 %v137
    %v394 = vunpack.c.l.b16 %v138
    %v395 = vunpack.c.l.b16 %v139
    %v396 = vunpack.c.l.b16 %v140
    %v397 = vunpack.c.l.b16 %v141
    %v398 = vunpack.c.l.b16 %v142
    %v399 = vunpack.c.l.b16 %v143
    %v400 = vunpack.c.l.b16 %v144
    %v401 = vunpack.c.l.b16 %v145
    %v402 = vunpack.c.l.b16 %v146
    %v403 = vunpack.c.l.b16 %v147
    %v404 = vunpack.c.l.b16 %v148
    %v405 = vunpack.c.l.b16 %v149
    %v406 = vunpack.c.l.b16 %v150
    %v407 = vunpack.c.l.b16 %v151
    %v408 = vunpack.c.l.b16 %v152
    %v409 = vunpack.c.l.b16 %v153
    %v410 = vunpack.c.l.b16 %v154
    %v411 = vunpack.c.l.b16 %v155
    %v412 = vunpack.c.l.b16 %v156
    %v413 = vunpack.c.l.b16 %v157
    %v414 = vunpack.c.l.b16 %v158
    %v415 = vunpack.c.l.b16 %v159
    %v416 = vunpack.c.l.b16 %v160
    %v417 = vunpack.c.l.b16 %v161
    %v418 = vunpack.c.l.b16 %v162
    %v419 = vunpack.c.l.b16 %v163
    %v420 = vunpack.c.l.b16 %v164
    %v421 = vunpack.c.l.b16 %v165
    %v422 = vunpack.c.l.b16 %v166
    %v423 = vunpack.c.l.b16 %v167
    %v424 = vunpack.c.l.b16 %v168
    %v425 = vunpack.c.l.b16 %v169
    %v426 = vunpack.c.l.b16 %v170
    %v427 = vunpack.c.l.b16 %v171
    %v428 = vunpack.c.l.b16 %v172
    %v429 = vunpack.c.l.b16 %v173
    %v430 = vunpack.c.l.b16 %v174
    %v431 = vunpack.c.l.b16 %v175
    %v432 = vunpack.c.l.b16 %v176
    %v433 = vunpack.c.l.b16 %v177
    %v434 = vunpack.c.l.b16 %v178
    %v435 = vunpack.c.l.b16 %v179
    %v436 = vunpack.c.l.b16 %v180
    %v437 = vunpack.c.l.b16 %v181
    %v438 = vunpack.c.l.b16 %v182
    %v439 = vunpack.c.l.b16 %v183
    %v440 = vunpack.c.l.b16 %v184
    %v441 = vunpack.c.l.b16 %v185
    %v442 = vunpack.c.l.b16 %v186
    %v443 = vunpack.c.l.b16 %v187
    %v444 = vunpack.c.l.b16 %v188
    %v445 = vunpack.c.l.b16 %v189
    %v446 = vunpack.c.l.b16 %v190
    %v447 = vunpack.c.l.b16 %v191
    %v448 = vunpack.c.l.b16 %v192
    %v449 = vunpack.c.l.b16 %v193
    %v450 = vunpack.c.l.b16 %v194
    %v451 = vunpack.c.l.b16 %v195
    %v452 = vunpack.c.l.b16 %v196
    %v453 = vunpack.c.l.b16 %v197
    %v454 = vunpack.c.l.b16 %v198
    %v455 = vunpack.c.l.b16 %v199
    %v456 = vunpack.c.l.b16 %v200
    %v457 = vunpack.c.l.b16 %v201
    %v458 = vunpack.c.l.b16 %v202
    %v459 = vunpack.c.l.b16 %v203
    %v460 = vunpack.c.l.b16 %v204
    %v461 = vunpack.c.l.b16 %v205
    %v462 = vunpack.c.l.b16 %v206
    %v463 = vunpack.c.l.b16 %v207
    %v464 = vunpack.c.l.b16 %v208
    %v465 = vunpack.c.l.b16 %v209
    %v466 = vunpack.c.l.b16 %v210
    %v467 = vunpack.c.l.b16 %v211
    %v468 = vunpack.c.l.b16 %v212
    %v469 = vunpack.c.l.b16 %v213
    %v470 = vunpack.c.l.b16 %v214
    %v471 = vunpack.c.l.b16 %v215
    %v472 = vunpack.c.l.b16 %v216
    %v473 = vunpack.c.l.b16 %v217
    %v474 = vunpack.c.l.b16 %v218
    %v475 = vunpack.c.l.b16 %v219
    %v476 = vunpack.c.l.b16 %v220
    %v477 = vunpack.c.l.b16 %v221
    %v478 = vunpack.c.l.b16 %v222
    %v479 = vunpack.c.l.b16 %v223
    %v480 = vunpack.c.l.b16 %v224
    %v481 = vunpack.c.l.b16 %v225
    %v482 = vunpack.c.l.b16 %v226
    %v483 = vunpack.c.l.b16 %v227
    %v484 = vunpack.c.l.b16 %v228
    %v485 = vunpack.c.l.b16 %v229
    %v486 = vunpack.c.l.b16 %v230
    %v487 = vunpack.c.l.b16 %v231
    %v488 = vunpack.c.l.b16 %v232
    %v489 = vunpack.c.l.b16 %v233
    %v490 = vunpack.c.l.b16 %v234
    %v491 = vunpack.c.l.b16 %v235
    %v492 = vunpack.c.l.b16 %v236
    %v493 = vunpack.c.l.b16 %v237
    %v494 = vunpack.c.l.b16 %v238
    %v495 = vunpack.c.l.b16 %v239
    %v496 = vunpack.c.l.b16 %v240
    %v497 = vunpack.c.l.b16 %v241
    %v498 = vunpack.c.l.b16 %v242
    %v499 = vunpack.c.l.b16 %v243
    %v500 = vunpack.c.l.b16 %v244
    %v501 = vunpack.c.l.b16 %v245
    %v502 = vunpack.c.l.b16 %v246
    %v503 = vunpack.c.l.b16 %v247
    %v504 = vunpack.c.l.b16 %v248
    %v505 = vunpack.c.l.b16 %v249
    %v506 = vunpack.c.l.b16 %v250
    %v507 = vunpack.c.l.b16 %v251
    %v508 = vpack.c.b16 %v381, %v380
    %v509 = vpack.c.b16 %v383, %v382
    %v510 = vpack.c.b16 %v385, %v384
    %v511 = vpack.c.b16 %v387, %v386
    %v512 = vpack.c.b16 %v389, %v388
    %v513 = vpack.c.b16 %v391, %v390
    %v514 = vpack.c.b16 %v393, %v392
    %v515 = vpack.c.b16 %v395, %v394
    %v516 = vpack.c.b16 %v397, %v396
    %v517 = vpack.c.b16 %v399, %v398
    %v518 = vpack.c.b16 %v401, %v400
    %v519 = vpack.c.b16 %v403, %v402
    %v520 = vpack.c.b16 %v405, %v404
    %v521 = vpack.c.b16 %v407, %v406
    %v522 = vpack.c.b16 %v409, %v408
    %v523 = vpack.c.b16 %v411, %v410
    %v524 = vpack.c.b16 %v413, %v412
    %v525 = vpack.c.b16 %v415, %v414
    %v526 = vpack.c.b16 %v417, %v416
    %v527 = vpack.c.b16 %v419, %v418
    %v528 = vpack.c.b16 %v421, %v420
    %v529 = vpack.c.b16 %v423, %v422
    %v530 = vpack.c.b16 %v425, %v424
    %v531 = vpack.c.b16 %v427, %v426
    %v532 = vpack.c.b16 %v429, %v428
    %v533 = vpack.c.b16 %v431, %v430
    %v534 = vpack.c.b16 %v433, %v432
    %v535 = vpack.c.b16 %v435, %v434
    %v536 = vpack.c.b16 %v437, %v436
    %v537 = vpack.c.b16 %v439, %v438
    %v538 = vpack.c.b16 %v441, %v440
    %v539 = vpack.c.b16 %v443, %v442
    %v540 = vpack.c.b16 %v445, %v444
    %v541 = vpack.c.b16 %v447, %v446
    %v542 = vpack.c.b16 %v449, %v448
    %v543 = vpack.c.b16 %v451, %v450
    %v544 = vpack.c.b16 %v453, %v452
    %v545 = vpack.c.b16 %v455, %v454
    %v546 = vpack.c.b16 %v457, %v456
    %v547 = vpack.c.b16 %v459, %v458
    %v548 = vpack.c.b16 %v461, %v460
    %v549 = vpack.c.b16 %v463, %v462
    %v550 = vpack.c.b16 %v465, %v464
    %v551 = vpack.c.b16 %v467, %v466
    %v552 = vpack.c.b16 %v469, %v468
    %v553 = vpack.c.b16 %v471, %v470
    %v554 = vpack.c.b16 %v473, %v472
    %v555 = vpack.c.b16 %v475, %v474
    %v556 = vpack.c.b16 %v477, %v476
    %v557 = vpack.c.b16 %v479, %v478
    %v558 = vpack.c.b16 %v481, %v480
    %v559 = vpack.c.b16 %v483, %v482
    %v560 = vpack.c.b16 %v485, %v484
    %v561 = vpack.c.b16 %v487, %v486
    %v562 = vpack.c.b16 %v489, %v488
    %v563 = vpack.c.b16 %v491, %v490
    %v564 = vpack.c.b16 %v493, %v492
    %v565 = vpack.c.b16 %v495, %v494
    %v566 = vpack.c.b16 %v497, %v496
    %v567 = vpack.c.b16 %v499, %v498
    %v568 = vpack.c.b16 %v501, %v500
    %v569 = vpack.c.b16 %v503, %v502
    %v570 = vpack.c.b16 %v505, %v504
    %v571 = vpack.c.b16 %v507, %v506
    %636 = vmatprep.subr.bf16.mxu0 0
    %637 = vmatpush1.bf16.msra.mxu0 %v515
    %638 = vmatprep.subr.bf16.mxu0 0
    %639 = vmatpush1.bf16.msra.mxu0 %v514
    %640 = vmatprep.subr.bf16.mxu0 0
    %641 = vmatpush1.bf16.msra.mxu0 %v513
    %642 = vmatprep.subr.bf16.mxu0 0
    %643 = vmatpush1.bf16.msra.mxu0 %v512
    %644 = vmatprep.subr.bf16.mxu0 0
    %645 = vmatpush1.bf16.msra.mxu0 %v511
    %646 = vmatprep.subr.bf16.mxu0 0
    %647 = vmatpush1.bf16.msra.mxu0 %v510
    %648 = vmatprep.subr.bf16.mxu0 0
    %649 = vmatpush1.bf16.msra.mxu0 %v509
    %650 = vmatprep.subr.bf16.mxu0 0
    %651 = vmatpush1.bf16.msra.mxu0 %v508
    %652 = vmatprep.subr.bf16.mxu0 0
    %653 = vmatpush2.bf16.msra.mxu0 %v523
    %654 = vmatprep.subr.bf16.mxu0 0
    %655 = vmatpush2.bf16.msra.mxu0 %v522
    %656 = vmatprep.subr.bf16.mxu0 0
    %657 = vmatpush2.bf16.msra.mxu0 %v521
    %658 = vmatprep.subr.bf16.mxu0 0
    %659 = vmatpush2.bf16.msra.mxu0 %v520
    %660 = vmatprep.subr.bf16.mxu0 0
    %661 = vmatpush2.bf16.msra.mxu0 %v519
    %662 = vmatprep.subr.bf16.mxu0 0
    %663 = vmatpush2.bf16.msra.mxu0 %v518
    %664 = vmatprep.subr.bf16.mxu0 0
    %665 = vmatpush2.bf16.msra.mxu0 %v517
    %666 = vmatprep.subr.bf16.mxu0 0
    %667 = vmatpush2.bf16.msra.mxu0 %v516
    %668 = vmatprep.mubr.bf16.mxu0 %v116
    %669 = vmatmul.mubr.bf16.gmra.mxu0 %v115
    %v670 = vpop.f32.mrf.mxu0
    %v671 = vadd.f32 0.0, %v670
    %v672 = vpop.f32.mrf.mxu0
    %v673 = vpop.f32.mrf.mxu0
    %v674 = vpop.f32.mrf.mxu0
    %675 = vdwg.mxu0
    %676 = vmatprep.subr.bf16.mxu0 0
    %677 = vmatpush1.bf16.msra.mxu0 %v531
    %678 = vmatprep.subr.bf16.mxu0 0
    %679 = vmatpush1.bf16.msra.mxu0 %v530
    %680 = vmatprep.subr.bf16.mxu0 0
    %681 = vmatpush1.bf16.msra.mxu0 %v529
    %682 = vmatprep.subr.bf16.mxu0 0
    %683 = vmatpush1.bf16.msra.mxu0 %v528
    %684 = vmatprep.subr.bf16.mxu0 0
    %685 = vmatpush1.bf16.msra.mxu0 %v527
    %686 = vmatprep.subr.bf16.mxu0 0
    %687 = vmatpush1.bf16.msra.mxu0 %v526
    %688 = vmatprep.subr.bf16.mxu0 0
    %689 = vmatpush1.bf16.msra.mxu0 %v525
    %690 = vmatprep.subr.bf16.mxu0 0
    %691 = vmatpush1.bf16.msra.mxu0 %v524
    %692 = vmatprep.subr.bf16.mxu0 0
    %693 = vmatpush2.bf16.msra.mxu0 %v539
    %694 = vmatprep.subr.bf16.mxu0 0
    %695 = vmatpush2.bf16.msra.mxu0 %v538
    %696 = vmatprep.subr.bf16.mxu0 0
    %697 = vmatpush2.bf16.msra.mxu0 %v537
    %698 = vmatprep.subr.bf16.mxu0 0
    %699 = vmatpush2.bf16.msra.mxu0 %v536
    %700 = vmatprep.subr.bf16.mxu0 0
    %701 = vmatpush2.bf16.msra.mxu0 %v535
    %702 = vmatprep.subr.bf16.mxu0 0
    %703 = vmatpush2.bf16.msra.mxu0 %v534
    %704 = vmatprep.subr.bf16.mxu0 0
    %705 = vmatpush2.bf16.msra.mxu0 %v533
    %706 = vmatprep.subr.bf16.mxu0 0
    %707 = vmatpush2.bf16.msra.mxu0 %v532
    %708 = vmatprep.mubr.bf16.mxu0 %v118
    %709 = vmatmul.mubr.bf16.gmra.mxu0 %v117
    %v710 = vpop.f32.mrf.mxu0
    %v711 = vadd.f32 %v671, %v710
    %v712 = vpop.f32.mrf.mxu0
    %v713 = vpop.f32.mrf.mxu0
    %v714 = vpop.f32.mrf.mxu0
    %715 = vdwg.mxu0
    %716 = vmatprep.subr.bf16.mxu0 0
    %717 = vmatpush1.bf16.msra.mxu0 %v547
    %718 = vmatprep.subr.bf16.mxu0 0
    %719 = vmatpush1.bf16.msra.mxu0 %v546
    %720 = vmatprep.subr.bf16.mxu0 0
    %721 = vmatpush1.bf16.msra.mxu0 %v545
    %722 = vmatprep.subr.bf16.mxu0 0
    %723 = vmatpush1.bf16.msra.mxu0 %v544
    %724 = vmatprep.subr.bf16.mxu0 0
    %725 = vmatpush1.bf16.msra.mxu0 %v543
    %726 = vmatprep.subr.bf16.mxu0 0
    %727 = vmatpush1.bf16.msra.mxu0 %v542
    %728 = vmatprep.subr.bf16.mxu0 0
    %729 = vmatpush1.bf16.msra.mxu0 %v541
    %730 = vmatprep.subr.bf16.mxu0 0
    %731 = vmatpush1.bf16.msra.mxu0 %v540
    %732 = vmatprep.subr.bf16.mxu0 0
    %733 = vmatpush2.bf16.msra.mxu0 %v555
    %734 = vmatprep.subr.bf16.mxu0 0
    %735 = vmatpush2.bf16.msra.mxu0 %v554
    %736 = vmatprep.subr.bf16.mxu0 0
    %737 = vmatpush2.bf16.msra.mxu0 %v553
    %738 = vmatprep.subr.bf16.mxu0 0
    %739 = vmatpush2.bf16.msra.mxu0 %v552
    %740 = vmatprep.subr.bf16.mxu0 0
    %741 = vmatpush2.bf16.msra.mxu0 %v551
    %742 = vmatprep.subr.bf16.mxu0 0
    %743 = vmatpush2.bf16.msra.mxu0 %v550
    %744 = vmatprep.subr.bf16.mxu0 0
    %745 = vmatpush2.bf16.msra.mxu0 %v549
    %746 = vmatprep.subr.bf16.mxu0 0
    %747 = vmatpush2.bf16.msra.mxu0 %v548
    %748 = vmatprep.mubr.bf16.mxu0 %v120
    %749 = vmatmul.mubr.bf16.gmra.mxu0 %v119
    %v750 = vpop.f32.mrf.mxu0
    %v751 = vadd.f32 %v711, %v750
    %v752 = vpop.f32.mrf.mxu0
    %v753 = vpop.f32.mrf.mxu0
    %v754 = vpop.f32.mrf.mxu0
    %755 = vdwg.mxu0
    %756 = vmatprep.subr.bf16.mxu0 0
    %757 = vmatpush1.bf16.msra.mxu0 %v563
    %758 = vmatprep.subr.bf16.mxu0 0
    %759 = vmatpush1.bf16.msra.mxu0 %v562
    %760 = vmatprep.subr.bf16.mxu0 0
    %761 = vmatpush1.bf16.msra.mxu0 %v561
    %762 = vmatprep.subr.bf16.mxu0 0
    %763 = vmatpush1.bf16.msra.mxu0 %v560
    %764 = vmatprep.subr.bf16.mxu0 0
    %765 = vmatpush1.bf16.msra.mxu0 %v559
    %766 = vmatprep.subr.bf16.mxu0 0
    %767 = vmatpush1.bf16.msra.mxu0 %v558
    %768 = vmatprep.subr.bf16.mxu0 0
    %769 = vmatpush1.bf16.msra.mxu0 %v557
    %770 = vmatprep.subr.bf16.mxu0 0
    %771 = vmatpush1.bf16.msra.mxu0 %v556
    %772 = vmatprep.subr.bf16.mxu0 0
    %773 = vmatpush2.bf16.msra.mxu0 %v571
    %774 = vmatprep.subr.bf16.mxu0 0
    %775 = vmatpush2.bf16.msra.mxu0 %v570
    %776 = vmatprep.subr.bf16.mxu0 0
    %777 = vmatpush2.bf16.msra.mxu0 %v569
    %778 = vmatprep.subr.bf16.mxu0 0
    %779 = vmatpush2.bf16.msra.mxu0 %v568
    %780 = vmatprep.subr.bf16.mxu0 0
    %781 = vmatpush2.bf16.msra.mxu0 %v567
    %782 = vmatprep.subr.bf16.mxu0 0
    %783 = vmatpush2.bf16.msra.mxu0 %v566
    %784 = vmatprep.subr.bf16.mxu0 0
    %785 = vmatpush2.bf16.msra.mxu0 %v565
    %786 = vmatprep.subr.bf16.mxu0 0
    %787 = vmatpush2.bf16.msra.mxu0 %v564
    %788 = vmatprep.mubr.bf16.mxu0 %v122
    %789 = vmatmul.mubr.bf16.gmra.mxu0 %v121
    %v790 = vpop.f32.mrf.mxu0
    %v791 = vadd.f32 %v751, %v790
    %v792 = vpop.f32.mrf.mxu0
    %v793 = vpop.f32.mrf.mxu0
    %v794 = vpop.f32.mrf.mxu0
    %795 = vdwg.mxu0
    %v796 = vadd.f32 %v123, %v791
    %797 = vst [vmem:[#allocation2] sm:$0x3] %v796
    %v798 = vrot.slane %v69, 4
    %v800 = vrot.slane %v70, 4
    %v802 = vcombine.low %v69, %v798
    %v804 = vunpack.c.l.s4 1934713408
    %v805 = vunpack.c.0.s8 %v804
    %v806 = vlaneseq
    %v807 = vshrl.u32 %v806, 7
    %v808 = vsub.s32 %v805, %v807
    %v809 = vrot.slane %v802, %v808
    %v810 = vcombine.high %v809, 0.0
    %v811 = vcombine.low %v70, %v800
    %v813 = vunpack.c.l.s4 1934713408
    %v814 = vunpack.c.0.s8 %v813
    %v815 = vlaneseq
    %v816 = vshrl.u32 %v815, 7
    %v817 = vsub.s32 %v814, %v816
    %v818 = vrot.slane %v811, %v817
    %v819 = vcombine.high %v818, 0.0
    %v824 = vcombine.low %v809, %v818
    %v826 = vunpack.c.l.s4 1983009808
    %v827 = vunpack.c.0.s8 %v826
    %v828 = vlaneseq
    %v829 = vshrl.u32 %v828, 7
    %v830 = vsub.s32 %v827, %v829
    %v831 = vrot.slane %v824, %v830
    %v832 = vcombine.high %v831, %v831
    %v833 = vcombine.low %v810, %v819
    %v835 = vunpack.c.l.s4 1983009808
    %v836 = vunpack.c.0.s8 %v835
    %v837 = vlaneseq
    %v838 = vshrl.u32 %v837, 7
    %v839 = vsub.s32 %v836, %v838
    %v840 = vrot.slane %v833, %v839
    %v841 = vcombine.high %v840, %v840
    %vm846 = vcmask 1043456
    %v847 = vsel %vm846, %v831, -inf
    %v848 = vsel %vm846, %v832, -inf
    %v849 = vmax.f32 %v847, %v848
    %850 = vmax.xlane.f32.xlu0 %v849
    %v851 = vpop.xlane.xlu0 %850
    %v852 = vsel %vm846, %v840, -inf
    %v853 = vsel %vm846, %v841, -inf
    %v854 = vmax.f32 %v852, %v853
    %855 = vmax.xlane.f32.xlu0 %v854
    %v856 = vpop.xlane.xlu0 %855
    %v859 = vlaneseq
    %v860 = vand.u32 %v859, 127
    %v861 = vlaneseq
    %v862 = vshrl.u32 %v861, 7
    %v863 = vsub.s32 %v860, %v862
    %v864 = vrot.slane %v851, %v863
    %v865 = vlaneseq
    %v866 = vshrl.u32 %v865, 7
    %v867 = vsub.s32 %v860, %v866
    %v868 = vrot.slane %v856, %v867
    %vm869 = vcmask 1041409
    %v870 = vsel %vm869, %v868, %v864
    %s872 = smul.u32 0, 2
    %s873 = scalar_lea.vmem [#allocation3], %s872
    %vm874 = vcmask 25600
    %875 = vst.msk [vmem:[%s873] sm:$0x3] %vm874, %v870
    // Predicated region
    $region38: #{tpu_custom_call.1} parent=1 // pred_check
      %p876 = pneg %p64
    $region39: #{tpu_custom_call.1} parent=1 // pred_check_branch
      %878 = sbr.rel (%p876) target = $region41
    $region40: #{tpu_custom_call.1} parent=1 // pred_region
      %v879 = vld [vmem:[#allocation2] sm:$0x3]
      %v880 = vld [vmem:[%s2] sm:$0x1]
      %v882 = vlaneseq
      %v883 = vshrl.u32 %v882, 7
      %v884 = vsub.s32 0, %v883
      %v885 = vrot.slane %v880, %v884
      %v887 = vadd.f32 %v879, %v885
      %v888 = vmax.f32 %v887, 0.0
      %v889 = vpack.c.bf16 %v888, %v888
      %v890 = vld [vmem:[#allocation9] sm:$0xf]
      %v891 = vld [vmem:[#allocation9 + $0x4] sm:$0xf]
      %v892 = vld [vmem:[#allocation9 + $0x8] sm:$0xf]
      %v893 = vld [vmem:[#allocation9 + $0xc] sm:$0xf]
      %v894 = vld [vmem:[#allocation9 + $0x10] sm:$0xf]
      %v895 = vld [vmem:[#allocation9 + $0x14] sm:$0xf]
      %v896 = vld [vmem:[#allocation9 + $0x18] sm:$0xf]
      %v897 = vld [vmem:[#allocation9 + $0x1c] sm:$0xf]
      %v898 = vld [vmem:[#allocation9 + $0x20] sm:$0xf]
      %v899 = vld [vmem:[#allocation9 + $0x24] sm:$0xf]
      %v900 = vld [vmem:[#allocation9 + $0x28] sm:$0xf]
      %v901 = vld [vmem:[#allocation9 + $0x2c] sm:$0xf]
      %v902 = vld [vmem:[#allocation9 + $0x30] sm:$0xf]
      %v903 = vld [vmem:[#allocation9 + $0x34] sm:$0xf]
      %v904 = vld [vmem:[#allocation9 + $0x38] sm:$0xf]
      %v905 = vld [vmem:[#allocation9 + $0x3c] sm:$0xf]
      %v906 = vld [vmem:[%s4] sm:$0x1]
      %v908 = vlaneseq
      %v909 = vshrl.u32 %v908, 7
      %v910 = vsub.s32 0, %v909
      %v911 = vrot.slane %v906, %v910
      %v929 = vunpack.c.l.b16 %v890
      %v930 = vunpack.c.l.b16 %v891
      %v931 = vunpack.c.l.b16 %v892
      %v932 = vunpack.c.l.b16 %v893
      %v933 = vunpack.c.l.b16 %v894
      %v934 = vunpack.c.l.b16 %v895
      %v935 = vunpack.c.l.b16 %v896
      %v936 = vunpack.c.l.b16 %v897
      %v937 = vunpack.c.l.b16 %v898
      %v938 = vunpack.c.l.b16 %v899
      %v939 = vunpack.c.l.b16 %v900
      %v940 = vunpack.c.l.b16 %v901
      %v941 = vunpack.c.l.b16 %v902
      %v942 = vunpack.c.l.b16 %v903
      %v943 = vunpack.c.l.b16 %v904
      %v944 = vunpack.c.l.b16 %v905
      %v945 = vpack.c.b16 %v930, %v929
      %v946 = vpack.c.b16 %v932, %v931
      %v947 = vpack.c.b16 %v934, %v933
      %v948 = vpack.c.b16 %v936, %v935
      %v949 = vpack.c.b16 %v938, %v937
      %v950 = vpack.c.b16 %v940, %v939
      %v951 = vpack.c.b16 %v942, %v941
      %v952 = vpack.c.b16 %v944, %v943
      %961 = vmatprep.subr.bf16.mxu0 0
      %962 = vmatpush1.bf16.msra.mxu0 %v952
      %963 = vmatprep.subr.bf16.mxu0 0
      %964 = vmatpush1.bf16.msra.mxu0 %v951
      %965 = vmatprep.subr.bf16.mxu0 0
      %966 = vmatpush1.bf16.msra.mxu0 %v950
      %967 = vmatprep.subr.bf16.mxu0 0
      %968 = vmatpush1.bf16.msra.mxu0 %v949
      %969 = vmatprep.subr.bf16.mxu0 0
      %970 = vmatpush1.bf16.msra.mxu0 %v948
      %971 = vmatprep.subr.bf16.mxu0 0
      %972 = vmatpush1.bf16.msra.mxu0 %v947
      %973 = vmatprep.subr.bf16.mxu0 0
      %974 = vmatpush1.bf16.msra.mxu0 %v946
      %975 = vmatprep.subr.bf16.mxu0 0
      %976 = vmatpush1.bf16.msra.mxu0 %v945
      %977 = vmatprep.subr.bf16.mxu0 0
      %978 = vmatpush2.bf16.msra.mxu0 0
      %979 = vmatprep.subr.bf16.mxu0 0
      %980 = vmatpush2.bf16.msra.mxu0 0
      %981 = vmatprep.subr.bf16.mxu0 0
      %982 = vmatpush2.bf16.msra.mxu0 0
      %983 = vmatprep.subr.bf16.mxu0 0
      %984 = vmatpush2.bf16.msra.mxu0 0
      %985 = vmatprep.subr.bf16.mxu0 0
      %986 = vmatpush2.bf16.msra.mxu0 0
      %987 = vmatprep.subr.bf16.mxu0 0
      %988 = vmatpush2.bf16.msra.mxu0 0
      %989 = vmatprep.subr.bf16.mxu0 0
      %990 = vmatpush2.bf16.msra.mxu0 0
      %991 = vmatprep.subr.bf16.mxu0 0
      %992 = vmatpush2.bf16.msra.mxu0 0
      %993 = vmatprep.mubr.bf16.mxu0 0
      %994 = vmatmul.mubr.bf16.gmra.mxu0 %v889
      %v995 = vpop.f32.mrf.mxu0
      %v996 = vadd.f32 %v911, %v995
      %v997 = vpop.f32.mrf.mxu0
      %v998 = vpop.f32.mrf.mxu0
      %v999 = vpop.f32.mrf.mxu0
      %1000 = vdwg.mxu0
      %v1001 = vmax.f32 %v996, 0.0
      %1002 = vst [vmem:[#allocation11] sm:$0x3] %v1001
      %v1003 = vld [vmem:[#allocation3] sm:$0x3]
      %vm1004 = vcmask 31744
      %v1005 = vsel %vm1004, %v1003, 0.0
      %1006 = vst [vmem:[#allocation10] sm:$0x3] %v1005
    $region41: #{tpu_custom_call.1} parent=1 // pred_fallthru
      _
    // Predicated region
    $region42: #{tpu_custom_call.1} parent=1 // pred_check
      _
    $region43: #{tpu_custom_call.1} parent=1 // pred_check_branch
      %1008 = sbr.rel (0) target = $region45
    $region44: #{tpu_custom_call.1} parent=1 // pred_region
      %s1010 = ssub.s32 32, 32
      %1011 = vsyncadd [#allocation6], %s1010
      %s1013 = sshll.u32 [#allocation10], 4
      %s1014 = int_to_ptr.vmem [resolvable:$true] %s1013
      %1016 = dma.vmem_to_hbm [thread:$0]  %s1014, 32, %s5, [#allocation6]
    $region45: #{tpu_custom_call.1} parent=1 // pred_fallthru
      _
    // Predicated region
    $region46: #{tpu_custom_call.1} parent=1 // pred_check
      _
    $region47: #{tpu_custom_call.1} parent=1 // pred_check_branch
      %1018 = sbr.rel (0) target = $region49
    $region48: #{tpu_custom_call.1} parent=1 // pred_region
      %s1020 = ssub.s32 32, 32
      %1021 = vsyncadd [#allocation12], %s1020
      %s1023 = sshll.u32 [#allocation11], 4
      %s1024 = int_to_ptr.vmem [resolvable:$true] %s1023
      %1026 = dma.vmem_to_hbm [thread:$0]  %s1024, 32, %s6, [#allocation12]
    $region49: #{tpu_custom_call.1} parent=1 // pred_fallthru
      _
    // Predicated region
    $region50: #{tpu_custom_call.1} parent=1 // pred_check
      _
    $region51: #{tpu_custom_call.1} parent=1 // pred_check_branch
      %1028 = sbr.rel (0) target = $region53
    $region52: #{tpu_custom_call.1} parent=1 // pred_region
      %1029 = dma.done [#allocation6], 32
    $region53: #{tpu_custom_call.1} parent=1 // pred_fallthru
      _
    // Predicated region
    $region54: #{tpu_custom_call.1} parent=1 // pred_check
      _
    $region55: #{tpu_custom_call.1} parent=1 // pred_check_branch
      %1031 = sbr.rel (0) target = $region57
    $region56: #{tpu_custom_call.1} parent=1 // pred_region
      %1032 = dma.done [#allocation12], 32
    $region57: #{tpu_custom_call.1} parent=1 // pred_fallthru
      _
    %1033 = vsyncpa [#allocation5], 1
    %1034 = vsyncpa [#allocation8], 1
    %1035 = vsyncpa [#allocation6], 1
    %1036 = vsyncpa [#allocation12], 1

</llo_original>
